<compile_context>
chip_gen: v5e
topology: v5e:2x2
jax: 0.10.0
libtpu: 0.0.40
codegen_flags: <defaults>
</compile_context>

<pallas_src>
import functools
import math

import jax
import jax.numpy as jnp
from jax.experimental import pallas as pl
from jax.experimental.pallas import tpu as pltpu

D_MODEL = 512
N_HEADS = 8
D_HEAD = 64
LN_EPS = 1e-5
NEG_INF = -1e30


# ---------------------------------------------------------------------------
# Kernel 1: K / V input projections (once per (batch, seq-tile)).
# ---------------------------------------------------------------------------
def kv_proj_kernel(k_ref, v_ref, wk_ref, bk_ref, wv_ref, bv_ref,
                   kp_ref, vp_ref):
    kp_ref[...] = (jnp.dot(k_ref[...], wk_ref[...],
                           preferred_element_type=jnp.float32)
                   + bk_ref[0]).astype(jnp.bfloat16)
    vp_ref[...] = (jnp.dot(v_ref[...], wv_ref[...],
                           preferred_element_type=jnp.float32)
                   + bv_ref[0]).astype(jnp.bfloat16)


# ---------------------------------------------------------------------------
# Kernel 2: flash attention + output projection + residual + LayerNorm.
# ---------------------------------------------------------------------------
def mha_attn_kernel(seq_len, needs_mask,
                    q_ref, kp_ref, vp_ref,
                    wq_ref, bq_ref, wo_ref, bo_ref, gamma_ref, beta_ref,
                    out_ref,
                    q_scr, m_scr, l_scr, acc_scr):
    ki = pl.program_id(2)
    n_kv = pl.num_programs(2)
    tkv = kp_ref.shape[0]

    # ---- init on the first KV tile of this (batch, q-tile) ----------------
    @pl.when(ki == 0)
    def _init():
        m_scr[...] = jnp.full(m_scr.shape, NEG_INF, jnp.float32)
        l_scr[...] = jnp.zeros(l_scr.shape, jnp.float32)
        acc_scr[...] = jnp.zeros(acc_scr.shape, jnp.float32)
        # 1/sqrt(d_head) is already folded into wq / bq by the wrapper.
        q_proj = jnp.dot(q_ref[...].astype(jnp.bfloat16), wq_ref[...],
                         preferred_element_type=jnp.float32) + bq_ref[0]
        q_scr[...] = q_proj.astype(jnp.bfloat16)

    if needs_mask:
        col_ids = ki * tkv + jax.lax.broadcasted_iota(jnp.int32, (1, tkv), 1)
        kv_valid = col_ids < seq_len              # (1, TKV), broadcasts over TQ

    # ---- per-head online softmax (heads statically unrolled) --------------
    for h in range(N_HEADS):
        lo = h * D_HEAD
        qh = q_scr[:, lo:lo + D_HEAD]             # (TQ, 64)  bf16 (from VMEM ref)
        kh = kp_ref[:, lo:lo + D_HEAD]            # (TKV, 64) bf16 (pre-projected)
        vh = vp_ref[:, lo:lo + D_HEAD]            # (TKV, 64) bf16 (pre-projected)

        # NT matmul via dot_general — no materialized kh.T (keeps the XLU free
        # for the row-max / row-sum reductions below).
        s = jax.lax.dot_general(qh, kh, (((1,), (1,)), ((), ())),
                                preferred_element_type=jnp.float32)  # (TQ, TKV)
        if needs_mask:
            s = jnp.where(kv_valid, s, NEG_INF)

        m_prev = m_scr[h]                         # (TQ, 1)
        l_prev = l_scr[h]
        m_new = jnp.maximum(m_prev, jnp.max(s, axis=-1, keepdims=True))
        alpha = jnp.exp(m_prev - m_new)
        p = jnp.exp(s - m_new)
        l_scr[h] = alpha * l_prev + jnp.sum(p, axis=-1, keepdims=True)
        m_scr[h] = m_new
        acc_scr[:, lo:lo + D_HEAD] = (
            alpha * acc_scr[:, lo:lo + D_HEAD]
            + jnp.dot(p.astype(jnp.bfloat16), vh,
                      preferred_element_type=jnp.float32))

    # ---- finalize on the last KV tile --------------------------------------
    @pl.when(ki == n_kv - 1)
    def _finalize():
        # Normalize each head in place (cheap VPU multiplies), then ONE
        # full-width K=512 output-projection matmul instead of 8 K=64 matmuls.
        for h in range(N_HEADS):
            lo = h * D_HEAD
            inv_l = pl.reciprocal(l_scr[h])       # exact (approx=False default)
            acc_scr[:, lo:lo + D_HEAD] = acc_scr[:, lo:lo + D_HEAD] * inv_l
        ctx = acc_scr[...].astype(jnp.bfloat16)   # (TQ, 512)
        y = (jnp.dot(ctx, wo_ref[...], preferred_element_type=jnp.float32)
             + bo_ref[0]
             + q_ref[...])                        # residual = raw queries (f32)
        # Dropout: identity at inference time.
        mu = jnp.mean(y, axis=-1, keepdims=True)
        var = jnp.mean((y - mu) ** 2, axis=-1, keepdims=True)
        y = (y - mu) * jax.lax.rsqrt(var + LN_EPS)
        out_ref[...] = (y * gamma_ref[0] + beta_ref[0]).astype(out_ref.dtype)


def _round_up(x, m):
    return ((x + m - 1) // m) * m


def multi_head_attention(queries, keys, values, params, *,
                         q_tile=256, kv_tile=512):
    """queries/keys/values: (B, S, 512) f32.  Returns (B, S, 512)."""
    B, S, D = queries.shape
    assert D == D_MODEL
    assert keys.shape == (B, S, D) and values.shape == (B, S, D)
    assert q_tile % 8 == 0 and kv_tile % q_tile == 0

    f32, bf16 = jnp.float32, jnp.bfloat16
    scale = 1.0 / math.sqrt(D_HEAD)               # 0.125 — exact

    # ---- choose tiles & pad S to the tile grid (no whole-seq fallback) ----
    s8 = _round_up(S, 8)
    if s8 <= kv_tile:
        TQ = TKV = s8
        S_pad = s8
    else:
        TQ, TKV = q_tile, kv_tile
        S_pad = _round_up(s8, kv_tile)
    n_q = S_pad // TQ
    n_kv = S_pad // TKV
    pad = S_pad - S
    needs_mask = pad > 0

    if pad:
        pad_cfg = ((0, 0), (0, pad), (0, 0))
        queries = jnp.pad(queries, pad_cfg)
        keys = jnp.pad(keys, pad_cfg)
        values = jnp.pad(values, pad_cfg)

    # K/V only ever consumed as bf16 -> cast at the boundary (halves HBM DMA).
    keys_bf = keys.astype(bf16)
    values_bf = values.astype(bf16)

    # PyTorch stores W as (out, in); kernels want (in, out).  Fold the attention
    # scale into the Q projection; weights bf16 for the MXU, biases / LN f32.
    wq_t = (params["wq"].T.astype(f32) * scale).astype(bf16)
    wk_t = params["wk"].T.astype(bf16)
    wv_t = params["wv"].T.astype(bf16)
    wo_t = params["wo"].T.astype(bf16)
    bq = (params["bq"].astype(f32) * scale).reshape(1, D)
    bk = params["bk"].astype(f32).reshape(1, D)
    bv = params["bv"].astype(f32).reshape(1, D)
    bo = params["bo"].astype(f32).reshape(1, D)
    gamma = params["gamma"].astype(f32).reshape(1, D)
    beta = params["beta"].astype(f32).reshape(1, D)

    # ---- 1) project K and V once per (batch, seq tile) --------------------
    seq_spec2 = pl.BlockSpec((None, TKV, D), lambda b, si: (b, si, 0))
    mat_spec2 = pl.BlockSpec((D, D), lambda b, si: (0, 0))
    vec_spec2 = pl.BlockSpec((1, D), lambda b, si: (0, 0))

    kp, vp = pl.pallas_call(
        kv_proj_kernel,
        out_shape=(jax.ShapeDtypeStruct((B, S_pad, D), bf16),
                   jax.ShapeDtypeStruct((B, S_pad, D), bf16)),
        grid_spec=pltpu.PrefetchScalarGridSpec(
            num_scalar_prefetch=0,
            grid=(B, S_pad // TKV),
            in_specs=[seq_spec2, seq_spec2,
                      mat_spec2, vec_spec2,
                      mat_spec2, vec_spec2],
            out_specs=[seq_spec2, seq_spec2],
        ),
        compiler_params=pltpu.CompilerParams(
            dimension_semantics=("parallel", "parallel"),
            vmem_limit_bytes=16 * 1024 * 1024,
        ),
    )(keys_bf, values_bf, wk_t, bk, wv_t, bv)

    # ---- 2) fused flash attention + out-proj + residual + LayerNorm -------
    q_spec = pl.BlockSpec((None, TQ, D), lambda b, qi, ki: (b, qi, 0))
    kv_spec = pl.BlockSpec((None, TKV, D), lambda b, qi, ki: (b, ki, 0))
    mat_spec = pl.BlockSpec((D, D), lambda b, qi, ki: (0, 0))
    vec_spec = pl.BlockSpec((1, D), lambda b, qi, ki: (0, 0))

    kernel = functools.partial(mha_attn_kernel, S, needs_mask)

    out = pl.pallas_call(
        kernel,
        out_shape=jax.ShapeDtypeStruct((B, S_pad, D), queries.dtype),
        grid_spec=pltpu.PrefetchScalarGridSpec(
            num_scalar_prefetch=0,
            grid=(B, n_q, n_kv),
            in_specs=[
                q_spec, kv_spec, kv_spec,       # raw Q (f32), projected K/V (bf16)
                mat_spec, vec_spec,             # Wq^T * scale, bq * scale
                mat_spec, vec_spec,             # Wo^T, bo
                vec_spec, vec_spec,             # gamma, beta
            ],
            out_specs=pl.BlockSpec((None, TQ, D), lambda b, qi, ki: (b, qi, 0)),
            scratch_shapes=[
                pltpu.VMEM((TQ, D_MODEL), bf16),     # projected + scaled queries
                pltpu.VMEM((N_HEADS, TQ, 1), f32),   # running max per head
                pltpu.VMEM((N_HEADS, TQ, 1), f32),   # running softmax denom
                pltpu.VMEM((TQ, D_MODEL), f32),      # unnormalized context
            ],
        ),
        compiler_params=pltpu.CompilerParams(
            # batch / query-tile axes shard across TensorCores; the KV axis
            # carries the online-softmax state -> arbitrary, last.
            dimension_semantics=("parallel", "parallel", "arbitrary"),
            vmem_limit_bytes=32 * 1024 * 1024,
        ),
    )(queries, kp, vp, wq_t, bq, wo_t, bo, gamma, beta)

    if pad:
        out = out[:, :S, :]
    return out


def init_params(key):
    """Deterministic init matching PyTorch nn.Linear / nn.LayerNorm defaults."""
    ks = jax.random.split(key, 8)
    bound = 1.0 / math.sqrt(D_MODEL)

    def lin(kw, kb):
        w = jax.random.uniform(kw, (D_MODEL, D_MODEL), jnp.float32, -bound, bound)
        b = jax.random.uniform(kb, (D_MODEL,), jnp.float32, -bound, bound)
        return w, b

    wq, bq = lin(ks[0], ks[1])
    wk, bk = lin(ks[2], ks[3])
    wv, bv = lin(ks[4], ks[5])
    wo, bo = lin(ks[6], ks[7])
    return {
        "wq": wq, "bq": bq,
        "wk": wk, "bk": bk,
        "wv": wv, "bv": bv,
        "wo": wo, "bo": bo,
        "gamma": jnp.ones((D_MODEL,), jnp.float32),
        "beta": jnp.zeros((D_MODEL,), jnp.float32),
    }


if __name__ == "__main__":
    key = jax.random.PRNGKey(0)
    k_param, kq, kk, kvk = jax.random.split(key, 4)

    B, S = 2, 8
    params = init_params(k_param)
    queries = jax.random.normal(kq, (B, S, D_MODEL), jnp.float32)
    keys = jax.random.normal(kk, (B, S, D_MODEL), jnp.float32)
    values = jax.random.normal(kvk, (B, S, D_MODEL), jnp.float32)

    out = multi_head_attention(queries, keys, values, params)
    jax.block_until_ready(out)
    assert out.shape == (B, S, D_MODEL)
    assert bool(jnp.all(jnp.isfinite(out)))
    print("KERNEL_OK")
</pallas_src>

<mosaic_0001>
module attributes {stable_mosaic.version = 11 : i64} {
  func.func @kv_proj_kernel(%arg0: i32, %arg1: i32, %arg2: memref<1x8x512xbf16, #tpu.memory_space<vmem>>, %arg3: memref<1x8x512xbf16, #tpu.memory_space<vmem>>, %arg4: memref<512x512xbf16, #tpu.memory_space<vmem>>, %arg5: memref<1x512xf32, #tpu.memory_space<vmem>>, %arg6: memref<512x512xbf16, #tpu.memory_space<vmem>>, %arg7: memref<1x512xf32, #tpu.memory_space<vmem>>, %arg8: memref<1x8x512xbf16, #tpu.memory_space<vmem>>, %arg9: memref<1x8x512xbf16, #tpu.memory_space<vmem>>) attributes {dimension_semantics = [#tpu.dimension_semantics<parallel>, #tpu.dimension_semantics<parallel>], iteration_bounds = array<i64: 2, 1>, scalar_prefetch = 0 : i64, scratch_operands = 0 : i64, tpu.core_type = #tpu.core_type<tc>, window_params = [{transform_indices = @transform_0, window_bounds = array<i64: 1, 8, 512>}, {transform_indices = @transform_1, window_bounds = array<i64: 1, 8, 512>}, {pipeline_mode = #tpu.pipeline_mode<synchronous>, transform_indices = @transform_2, window_bounds = array<i64: 512, 512>}, {pipeline_mode = #tpu.pipeline_mode<synchronous>, transform_indices = @transform_3, window_bounds = array<i64: 1, 512>}, {pipeline_mode = #tpu.pipeline_mode<synchronous>, transform_indices = @transform_4, window_bounds = array<i64: 512, 512>}, {pipeline_mode = #tpu.pipeline_mode<synchronous>, transform_indices = @transform_5, window_bounds = array<i64: 1, 512>}, {transform_indices = @transform_6, window_bounds = array<i64: 1, 8, 512>}, {transform_indices = @transform_7, window_bounds = array<i64: 1, 8, 512>}]} {
    %c0 = arith.constant 0 : index
    %c0_0 = arith.constant 0 : index
    %c0_1 = arith.constant 0 : index
    %0 = vector.load %arg2[%c0, %c0_0, %c0_1] : memref<1x8x512xbf16, #tpu.memory_space<vmem>>, vector<1x8x512xbf16>
    %1 = vector.shape_cast %0 : vector<1x8x512xbf16> to vector<8x512xbf16>
    %c0_2 = arith.constant 0 : index
    %c0_3 = arith.constant 0 : index
    %2 = vector.load %arg4[%c0_2, %c0_3] : memref<512x512xbf16, #tpu.memory_space<vmem>>, vector<512x512xbf16>
    %cst = arith.constant dense<0.000000e+00> : vector<8x512xf32>
    %3 = tpu.matmul %1, %2, %cst {dimension_numbers = #tpu.dot_dimension_numbers<[1], [0], [0], [1], [0, 0, 1, 1], [], []>} : vector<8x512xbf16>, vector<512x512xbf16>, vector<8x512xf32> -> vector<8x512xf32>
    %c0_4 = arith.constant 0 : index
    %c0_5 = arith.constant 0 : index
    %4 = vector.load %arg5[%c0_4, %c0_5] : memref<1x512xf32, #tpu.memory_space<vmem>>, vector<1x512xf32>
    %5 = vector.shape_cast %4 : vector<1x512xf32> to vector<512xf32>
    %6 = vector.shape_cast %5 : vector<512xf32> to vector<1x512xf32>
    %7 = vector.broadcast %6 : vector<1x512xf32> to vector<8x512xf32>
    %8 = arith.addf %3, %7 : vector<8x512xf32>
    %9 = arith.truncf %8 : vector<8x512xf32> to vector<8x512xbf16>
    %c0_6 = arith.constant 0 : index
    %c0_7 = arith.constant 0 : index
    %c0_8 = arith.constant 0 : index
    %10 = vector.load %arg8[%c0_6, %c0_7, %c0_8] : memref<1x8x512xbf16, #tpu.memory_space<vmem>>, vector<1x8x512xbf16>
    %11 = vector.shape_cast %10 : vector<1x8x512xbf16> to vector<8x512xbf16>
    %12 = vector.shape_cast %9 : vector<8x512xbf16> to vector<1x8x512xbf16>
    tpu.vector_store %arg8[%c0_6, %c0_7, %c0_8], %12 {strides = array<i32>} : memref<1x8x512xbf16, #tpu.memory_space<vmem>>, vector<1x8x512xbf16>,
    %c0_9 = arith.constant 0 : index
    %c0_10 = arith.constant 0 : index
    %c0_11 = arith.constant 0 : index
    %13 = vector.load %arg3[%c0_9, %c0_10, %c0_11] : memref<1x8x512xbf16, #tpu.memory_space<vmem>>, vector<1x8x512xbf16>
    %14 = vector.shape_cast %13 : vector<1x8x512xbf16> to vector<8x512xbf16>
    %c0_12 = arith.constant 0 : index
    %c0_13 = arith.constant 0 : index
    %15 = vector.load %arg6[%c0_12, %c0_13] : memref<512x512xbf16, #tpu.memory_space<vmem>>, vector<512x512xbf16>
    %cst_14 = arith.constant dense<0.000000e+00> : vector<8x512xf32>
    %16 = tpu.matmul %14, %15, %cst_14 {dimension_numbers = #tpu.dot_dimension_numbers<[1], [0], [0], [1], [0, 0, 1, 1], [], []>} : vector<8x512xbf16>, vector<512x512xbf16>, vector<8x512xf32> -> vector<8x512xf32>
    %c0_15 = arith.constant 0 : index
    %c0_16 = arith.constant 0 : index
    %17 = vector.load %arg7[%c0_15, %c0_16] : memref<1x512xf32, #tpu.memory_space<vmem>>, vector<1x512xf32>
    %18 = vector.shape_cast %17 : vector<1x512xf32> to vector<512xf32>
    %19 = vector.shape_cast %18 : vector<512xf32> to vector<1x512xf32>
    %20 = vector.broadcast %19 : vector<1x512xf32> to vector<8x512xf32>
    %21 = arith.addf %16, %20 : vector<8x512xf32>
    %22 = arith.truncf %21 : vector<8x512xf32> to vector<8x512xbf16>
    %c0_17 = arith.constant 0 : index
    %c0_18 = arith.constant 0 : index
    %c0_19 = arith.constant 0 : index
    %23 = vector.load %arg9[%c0_17, %c0_18, %c0_19] : memref<1x8x512xbf16, #tpu.memory_space<vmem>>, vector<1x8x512xbf16>
    %24 = vector.shape_cast %23 : vector<1x8x512xbf16> to vector<8x512xbf16>
    %25 = vector.shape_cast %22 : vector<8x512xbf16> to vector<1x8x512xbf16>
    tpu.vector_store %arg9[%c0_17, %c0_18, %c0_19], %25 {strides = array<i32>} : memref<1x8x512xbf16, #tpu.memory_space<vmem>>, vector<1x8x512xbf16>,
    return
  }
  func.func @transform_0(%arg0: i32, %arg1: i32) -> (i32, i32, i32) {
    %c0_i32 = arith.constant 0 : i32
    %c0_i32_0 = arith.constant 0 : i32
    return %arg0, %arg1, %c0_i32 : i32, i32, i32
  }
  func.func @transform_1(%arg0: i32, %arg1: i32) -> (i32, i32, i32) {
    %c0_i32 = arith.constant 0 : i32
    %c0_i32_0 = arith.constant 0 : i32
    return %arg0, %arg1, %c0_i32 : i32, i32, i32
  }
  func.func @transform_2(%arg0: i32, %arg1: i32) -> (i32, i32) {
    %c0_i32 = arith.constant 0 : i32
    %c0_i32_0 = arith.constant 0 : i32
    %c0_i32_1 = arith.constant 0 : i32
    return %c0_i32, %c0_i32_0 : i32, i32
  }
  func.func @transform_3(%arg0: i32, %arg1: i32) -> (i32, i32) {
    %c0_i32 = arith.constant 0 : i32
    %c0_i32_0 = arith.constant 0 : i32
    %c0_i32_1 = arith.constant 0 : i32
    return %c0_i32, %c0_i32_0 : i32, i32
  }
  func.func @transform_4(%arg0: i32, %arg1: i32) -> (i32, i32) {
    %c0_i32 = arith.constant 0 : i32
    %c0_i32_0 = arith.constant 0 : i32
    %c0_i32_1 = arith.constant 0 : i32
    return %c0_i32, %c0_i32_0 : i32, i32
  }
  func.func @transform_5(%arg0: i32, %arg1: i32) -> (i32, i32) {
    %c0_i32 = arith.constant 0 : i32
    %c0_i32_0 = arith.constant 0 : i32
    %c0_i32_1 = arith.constant 0 : i32
    return %c0_i32, %c0_i32_0 : i32, i32
  }
  func.func @transform_6(%arg0: i32, %arg1: i32) -> (i32, i32, i32) {
    %c0_i32 = arith.constant 0 : i32
    %c0_i32_0 = arith.constant 0 : i32
    return %arg0, %arg1, %c0_i32 : i32, i32, i32
  }
  func.func @transform_7(%arg0: i32, %arg1: i32) -> (i32, i32, i32) {
    %c0_i32 = arith.constant 0 : i32
    %c0_i32_0 = arith.constant 0 : i32
    return %arg0, %arg1, %c0_i32 : i32, i32, i32
  }
}

</mosaic_0001>

<llo_original>
// kernel: tpu_custom_call.1
$region0: #{tpu_custom_call.1}
  #allocation0 [shape = 'u32[]', space=smem, size = 0x4, offset = 0x4, fixed_abs, tag = 'smem constant byte address 0x4 - core index']
  #allocation1 [shape = 'u32[72,128]{1,0:T(1,128)}', space=vmem, size = 0x9000, scoped, tag = 'internal scratch']
  %s0 = inlined_call_operand.hbm [shape: bf16[2,8,512], index: 0, kind: input, shape index: {}]
  %s1 = inlined_call_operand.hbm [shape: bf16[2,8,512], index: 1, kind: input, shape index: {}]
  %s2 = inlined_call_operand.hbm [shape: bf16[512,512], index: 2, kind: input, shape index: {}]
  %s3 = inlined_call_operand.hbm [shape: f32[1,512], index: 3, kind: input, shape index: {}]
  %s4 = inlined_call_operand.hbm [shape: bf16[512,512], index: 4, kind: input, shape index: {}]
  %s5 = inlined_call_operand.vmem [shape: f32[1,512], index: 5, kind: input, shape index: {}]
  %s6 = inlined_call_operand.hbm [shape: bf16[2,8,512], index: 6, kind: output, shape index: {0}]
  %s7 = inlined_call_operand.hbm [shape: bf16[2,8,512], index: 7, kind: output, shape index: {1}]
  %8 = xla_tuple %s6, %s7
  %s9 = sld [smem:[#allocation0]]
  $region85: #{tpu_custom_call.1} parent=0
    _
  %s11 = ssub.s32 1, %s9
  %s12 = scalar_select 0, %s11, %s9
  $region1: #{tpu_custom_call.1} parent=0
    #allocation2 [shape = 'u8[16384]{0}', space=vmem, size = 0x4000, scoped, tag = 'input window, operand 0']
    #allocation3 [shape = 's32[2]{0}', space=sflag, size = 0x8, scoped, tag = 'scoped memory for tpu_custom_call.1']
    #allocation4 [shape = 's32[2]{0}', space=sflag, size = 0x8, scoped, tag = 'scoped memory for tpu_custom_call.1']
    #allocation5 [shape = 'u8[16384]{0}', space=vmem, size = 0x4000, scoped, tag = 'input window, operand 1']
    #allocation6 [shape = 's32[2]{0}', space=sflag, size = 0x8, scoped, tag = 'scoped memory for tpu_custom_call.1']
    #allocation7 [shape = 'u8[524288]{0}', space=vmem, size = 0x80000, scoped, tag = 'input window, operand 2, single buffered']
    #allocation8 [shape = 'u8[2048]{0}', space=vmem, size = 0x800, scoped, tag = 'input window, operand 3, single buffered']
    #allocation9 [shape = 's32[1]{0}', space=sflag, size = 0x4, scoped, tag = 'scoped memory for tpu_custom_call.1']
    #allocation10 [shape = 'u8[524288]{0}', space=vmem, size = 0x80000, scoped, tag = 'input window, operand 4, single buffered']
    #allocation11 [shape = 'u8[16384]{0}', space=vmem, size = 0x4000, scoped, tag = 'output window, operand 0']
    #allocation12 [shape = 'u8[16384]{0}', space=vmem, size = 0x4000, scoped, tag = 'output window, operand 1']
    #allocation13 [shape = 's32[2]{0}', space=sflag, size = 0x8, scoped, tag = 'scoped memory for tpu_custom_call.1']
    %13 = vsyncpa [#allocation3], 0
    %s14 = scalar_lea.sflag [#allocation3], 1
    %15 = vsyncpa %s14, 0
    %16 = vsyncpa [#allocation6], 0
    %s17 = scalar_lea.sflag [#allocation6], 1
    %18 = vsyncpa %s17, 0
    %19 = vsyncpa [#allocation9], 0
    %20 = vsyncpa [#allocation4], 0
    %s21 = scalar_lea.sflag [#allocation4], 1
    %22 = vsyncpa %s21, 0
    %23 = vsyncpa [#allocation13], 0
    %s24 = scalar_lea.sflag [#allocation13], 1
    %25 = vsyncpa %s24, 0
    loop: start=0, step=1, limit=4
    $region2: #{tpu_custom_call.1} parent=1 // loop_pre_header
      _
    $region3: #{tpu_custom_call.1} parent=1 // loop_header
      %s27 = sphi 0, %s31
      %p28 = scmp.ge.s32.totalorder %s27, 4
      %s34 = sphi 0, %s46
      %s35 = sphi 0, %s42
      %s36 = sphi 0, %s34
      %s37 = sphi 0, %s35
      %s38 = sphi 0, %s36
      %s39 = sphi 0, %s37
      %s51 = sphi 0, %s53
      %s54 = sphi 0, %s51
      %s55 = sphi 0, %s54
      %s71 = sphi 0, %s55
      %s79 = sphi 0, %s81
      %s82 = sphi 0, %s79
      %s83 = sphi 0, %s82
      %s99 = sphi 0, %s83
      %s103 = sphi 0, %s103
      %s105 = sphi 0, %s103
      %s106 = sphi 0, %s105
      %s120 = sphi 0, %s106
      %s124 = sphi 0, %s124
      %s126 = sphi 0, %s124
      %s127 = sphi 0, %s126
      %s141 = sphi 0, %s127
      %s145 = sphi 0, %s145
      %s147 = sphi 0, %s145
      %s148 = sphi 0, %s147
      %s162 = sphi 0, %s148
      %s166 = sphi 0, %s166
      %s168 = sphi 0, %s166
      %s169 = sphi 0, %s168
      %s183 = sphi 0, %s169
      %s191 = sphi 0, %s193
      %s194 = sphi 0, %s191
      %s195 = sphi 0, %s194
      %s211 = sphi 0, %s195
      %s219 = sphi 0, %s221
      %s222 = sphi 0, %s219
      %s223 = sphi 0, %s222
      %s239 = sphi 0, %s223
    $region4: #{tpu_custom_call.1} parent=1 // loop_header_branch
      %30 = sbr.rel (%p28) target = $region8
    $region5: #{tpu_custom_call.1} parent=1 // loop_body
      %s32 = ssub.s32 %s27, 1
      %s33 = ssub.s32 %s27, 2
      %s40 = sadd.s32 1, %s35
      %p41 = scmp.ge.s32.totalorder %s40, 1
      %s42 = scalar_select %p41, 0, %s40
      %s43 = sadd.s32 1, %s34
      %s44 = scalar_select %p41, %s43, %s34
      %p45 = scmp.ge.s32.totalorder %s44, 2
      %s46 = scalar_select %p45, 0, %s44
      %s47 = ssub.s32 %s34, %s46
      %s48 = ssub.s32 %s35, %s42
      %s49 = sor.u32 %s47, %s48
      %p50 = scmp.eq.s32.totalorder %s49, 0
      %s52 = sadd.s32 %s51, 1
      %s53 = scalar_select %p50, %s51, %s52
      %p56 = pneg %p50
      %p57 = scmp.eq.s32.totalorder %s27, 1
      %p58 = por %p56, %p57
      %p59 = scmp.ne.s32.totalorder %s51, %s54
      %p60 = scmp.eq.s32.totalorder %s27, 0
      %p61 = por %p59, %p60
      %p62 = scmp.ne.s32.totalorder %s51, %s54
      %p63 = scmp.eq.s32.totalorder %s32, 1
      %p64 = por %p62, %p63
      %p65 = scmp.ne.s32.totalorder %s54, %s55
      %p66 = scmp.eq.s32.totalorder %s32, 0
      %p67 = por %p65, %p66
      %p68 = scmp.ne.s32.totalorder %s54, %s55
      %p69 = scmp.eq.s32.totalorder %s33, 1
      %p70 = por %p68, %p69
      %p72 = scmp.ne.s32.totalorder %s55, %s71
      %p73 = scmp.eq.s32.totalorder %s33, 0
      %p74 = por %p72, %p73
      %s75 = ssub.s32 %s34, %s46
      %s76 = ssub.s32 %s35, %s42
      %s77 = sor.u32 %s75, %s76
      %p78 = scmp.eq.s32.totalorder %s77, 0
      %s80 = sadd.s32 %s79, 1
      %s81 = scalar_select %p78, %s79, %s80
      %p84 = pneg %p78
      %p85 = scmp.eq.s32.totalorder %s27, 1
      %p86 = por %p84, %p85
      %p87 = scmp.ne.s32.totalorder %s79, %s82
      %p88 = scmp.eq.s32.totalorder %s27, 0
      %p89 = por %p87, %p88
      %p90 = scmp.ne.s32.totalorder %s79, %s82
      %p91 = scmp.eq.s32.totalorder %s32, 1
      %p92 = por %p90, %p91
      %p93 = scmp.ne.s32.totalorder %s82, %s83
      %p94 = scmp.eq.s32.totalorder %s32, 0
      %p95 = por %p93, %p94
      %p96 = scmp.ne.s32.totalorder %s82, %s83
      %p97 = scmp.eq.s32.totalorder %s33, 1
      %p98 = por %p96, %p97
      %p100 = scmp.ne.s32.totalorder %s83, %s99
      %p101 = scmp.eq.s32.totalorder %s33, 0
      %p102 = por %p100, %p101
      %s104 = sadd.s32 %s103, 1
      %p107 = scmp.eq.s32.totalorder %s27, 1
      %p108 = scmp.ne.s32.totalorder %s103, %s105
      %p109 = scmp.eq.s32.totalorder %s27, 0
      %p110 = por %p108, %p109
      %p111 = scmp.ne.s32.totalorder %s103, %s105
      %p112 = scmp.eq.s32.totalorder %s32, 1
      %p113 = por %p111, %p112
      %p114 = scmp.ne.s32.totalorder %s105, %s106
      %p115 = scmp.eq.s32.totalorder %s32, 0
      %p116 = por %p114, %p115
      %p117 = scmp.ne.s32.totalorder %s105, %s106
      %p118 = scmp.eq.s32.totalorder %s33, 1
      %p119 = por %p117, %p118
      %p121 = scmp.ne.s32.totalorder %s106, %s120
      %p122 = scmp.eq.s32.totalorder %s33, 0
      %p123 = por %p121, %p122
      %s125 = sadd.s32 %s124, 1
      %p128 = scmp.eq.s32.totalorder %s27, 1
      %p129 = scmp.ne.s32.totalorder %s124, %s126
      %p130 = scmp.eq.s32.totalorder %s27, 0
      %p131 = por %p129, %p130
      %p132 = scmp.ne.s32.totalorder %s124, %s126
      %p133 = scmp.eq.s32.totalorder %s32, 1
      %p134 = por %p132, %p133
      %p135 = scmp.ne.s32.totalorder %s126, %s127
      %p136 = scmp.eq.s32.totalorder %s32, 0
      %p137 = por %p135, %p136
      %p138 = scmp.ne.s32.totalorder %s126, %s127
      %p139 = scmp.eq.s32.totalorder %s33, 1
      %p140 = por %p138, %p139
      %p142 = scmp.ne.s32.totalorder %s127, %s141
      %p143 = scmp.eq.s32.totalorder %s33, 0
      %p144 = por %p142, %p143
      %s146 = sadd.s32 %s145, 1
      %p149 = scmp.eq.s32.totalorder %s27, 1
      %p150 = scmp.ne.s32.totalorder %s145, %s147
      %p151 = scmp.eq.s32.totalorder %s27, 0
      %p152 = por %p150, %p151
      %p153 = scmp.ne.s32.totalorder %s145, %s147
      %p154 = scmp.eq.s32.totalorder %s32, 1
      %p155 = por %p153, %p154
      %p156 = scmp.ne.s32.totalorder %s147, %s148
      %p157 = scmp.eq.s32.totalorder %s32, 0
      %p158 = por %p156, %p157
      %p159 = scmp.ne.s32.totalorder %s147, %s148
      %p160 = scmp.eq.s32.totalorder %s33, 1
      %p161 = por %p159, %p160
      %p163 = scmp.ne.s32.totalorder %s148, %s162
      %p164 = scmp.eq.s32.totalorder %s33, 0
      %p165 = por %p163, %p164
      %s167 = sadd.s32 %s166, 1
      %p170 = scmp.eq.s32.totalorder %s27, 1
      %p171 = scmp.ne.s32.totalorder %s166, %s168
      %p172 = scmp.eq.s32.totalorder %s27, 0
      %p173 = por %p171, %p172
      %p174 = scmp.ne.s32.totalorder %s166, %s168
      %p175 = scmp.eq.s32.totalorder %s32, 1
      %p176 = por %p174, %p175
      %p177 = scmp.ne.s32.totalorder %s168, %s169
      %p178 = scmp.eq.s32.totalorder %s32, 0
      %p179 = por %p177, %p178
      %p180 = scmp.ne.s32.totalorder %s168, %s169
      %p181 = scmp.eq.s32.totalorder %s33, 1
      %p182 = por %p180, %p181
      %p184 = scmp.ne.s32.totalorder %s169, %s183
      %p185 = scmp.eq.s32.totalorder %s33, 0
      %p186 = por %p184, %p185
      %s187 = ssub.s32 %s34, %s46
      %s188 = ssub.s32 %s35, %s42
      %s189 = sor.u32 %s187, %s188
      %p190 = scmp.eq.s32.totalorder %s189, 0
      %s192 = sadd.s32 %s191, 1
      %s193 = scalar_select %p190, %s191, %s192
      %p196 = pneg %p190
      %p197 = scmp.eq.s32.totalorder %s27, 1
      %p198 = por %p196, %p197
      %p199 = scmp.ne.s32.totalorder %s191, %s194
      %p200 = scmp.eq.s32.totalorder %s27, 0
      %p201 = por %p199, %p200
      %p202 = scmp.ne.s32.totalorder %s191, %s194
      %p203 = scmp.eq.s32.totalorder %s32, 1
      %p204 = por %p202, %p203
      %p205 = scmp.ne.s32.totalorder %s194, %s195
      %p206 = scmp.eq.s32.totalorder %s32, 0
      %p207 = por %p205, %p206
      %p208 = scmp.ne.s32.totalorder %s194, %s195
      %p209 = scmp.eq.s32.totalorder %s33, 1
      %p210 = por %p208, %p209
      %p212 = scmp.ne.s32.totalorder %s195, %s211
      %p213 = scmp.eq.s32.totalorder %s33, 0
      %p214 = por %p212, %p213
      %s215 = ssub.s32 %s34, %s46
      %s216 = ssub.s32 %s35, %s42
      %s217 = sor.u32 %s215, %s216
      %p218 = scmp.eq.s32.totalorder %s217, 0
      %s220 = sadd.s32 %s219, 1
      %s221 = scalar_select %p218, %s219, %s220
      %p224 = pneg %p218
      %p225 = scmp.eq.s32.totalorder %s27, 1
      %p226 = por %p224, %p225
      %p227 = scmp.ne.s32.totalorder %s219, %s222
      %p228 = scmp.eq.s32.totalorder %s27, 0
      %p229 = por %p227, %p228
      %p230 = scmp.ne.s32.totalorder %s219, %s222
      %p231 = scmp.eq.s32.totalorder %s32, 1
      %p232 = por %p230, %p231
      %p233 = scmp.ne.s32.totalorder %s222, %s223
      %p234 = scmp.eq.s32.totalorder %s32, 0
      %p235 = por %p233, %p234
      %p236 = scmp.ne.s32.totalorder %s222, %s223
      %p237 = scmp.eq.s32.totalorder %s33, 1
      %p238 = por %p236, %p237
      %p240 = scmp.ne.s32.totalorder %s223, %s239
      %p241 = scmp.eq.s32.totalorder %s33, 0
      %p242 = por %p240, %p241
      %p243 = scmp.le.s32.totalorder 1, %s27
      %p244 = scmp.lt.s32.totalorder %s27, 3
      %p245 = pnand %p243, %p244
      %p246 = pneg %p245
      // Predicated region
      $region9: #{tpu_custom_call.1} parent=5 // pred_check
        _
      $region10: #{tpu_custom_call.1} parent=5 // pred_check_branch
        %248 = sbr.rel (%p245) target = $region12
      $region11: #{tpu_custom_call.1} parent=5 // pred_region
        %s249 = ssub.s32 %s27, 1
        // Predicated region
        $region13: #{tpu_custom_call.1} parent=11 // pred_check
          %p250 = pneg %p116
        $region14: #{tpu_custom_call.1} parent=11 // pred_check_branch
          %252 = sbr.rel (%p250) target = $region16
        $region15: #{tpu_custom_call.1} parent=11 // pred_region
          %254 = vsyncadd [#allocation6], 0
          %s255 = sshll.u32 %s2, 4
          %s256 = int_to_ptr.hbm [resolvable:$true] %s255
          %s257 = sshll.u32 [#allocation7], 4
          %s258 = int_to_ptr.vmem [resolvable:$true] %s257
          %263 = dma.hbm_to_vmem [thread:$0]  %s256, 16384, %s258, [#allocation6], 256, 256, 16
        $region16: #{tpu_custom_call.1} parent=11 // pred_fallthru
          _
        // Predicated region
        $region17: #{tpu_custom_call.1} parent=11 // pred_check
          %p264 = pneg %p137
        $region18: #{tpu_custom_call.1} parent=11 // pred_check_branch
          %266 = sbr.rel (%p264) target = $region20
        $region19: #{tpu_custom_call.1} parent=11 // pred_region
          %268 = vsyncadd [#allocation9], 0
          %s270 = sshll.u32 %s3, 4
          %s271 = int_to_ptr.hbm [resolvable:$true] %s270
          %s272 = sshll.u32 [#allocation8], 4
          %s273 = int_to_ptr.vmem [resolvable:$true] %s272
          %275 = dma.hbm_to_vmem [thread:$0]  %s271, 64, %s273, [#allocation9]
        $region20: #{tpu_custom_call.1} parent=11 // pred_fallthru
          _
        // Predicated region
        $region21: #{tpu_custom_call.1} parent=11 // pred_check
          %p276 = pneg %p158
        $region22: #{tpu_custom_call.1} parent=11 // pred_check_branch
          %278 = sbr.rel (%p276) target = $region24
        $region23: #{tpu_custom_call.1} parent=11 // pred_region
          %280 = vsyncadd [#allocation9], 0
          %s281 = sshll.u32 %s4, 4
          %s282 = int_to_ptr.hbm [resolvable:$true] %s281
          %s283 = sshll.u32 [#allocation10], 4
          %s284 = int_to_ptr.vmem [resolvable:$true] %s283
          %289 = dma.hbm_to_vmem [thread:$0]  %s282, 16384, %s284, [#allocation9], 256, 256, 16
        $region24: #{tpu_custom_call.1} parent=11 // pred_fallthru
          _
        // Predicated region
        $region25: #{tpu_custom_call.1} parent=11 // pred_check
          %p290 = pneg %p179
        $region26: #{tpu_custom_call.1} parent=11 // pred_check_branch
          %292 = sbr.rel (%p290) target = $region28
        $region27: #{tpu_custom_call.1} parent=11 // pred_region
          _
        $region28: #{tpu_custom_call.1} parent=11 // pred_fallthru
          _
      $region12: #{tpu_custom_call.1} parent=5 // pred_fallthru
        _
      %p293 = scmp.lt.s32.totalorder %s27, 2
      // Predicated region
      $region29: #{tpu_custom_call.1} parent=5 // pred_check
        %p294 = pneg %p293
      $region30: #{tpu_custom_call.1} parent=5 // pred_check_branch
        %296 = sbr.rel (%p294) target = $region32
      $region31: #{tpu_custom_call.1} parent=5 // pred_region
        // Predicated region
        $region33: #{tpu_custom_call.1} parent=31 // pred_check
          %p297 = pneg %p61
        $region34: #{tpu_custom_call.1} parent=31 // pred_check_branch
          %299 = sbr.rel (%p297) target = $region36
        $region35: #{tpu_custom_call.1} parent=31 // pred_region
          %s300 = sand.u32 %s51, 1
          %s301 = scalar_lea.sflag [#allocation3], %s300
          %s302 = sand.u32 %s51, 1
          %s303 = smul.addr %s302, 16
          %s304 = scalar_lea.vmem [#allocation2], %s303
          %306 = vsyncadd %s301, 0
          %s307 = smul.addr %s35, 4
          %s308 = smul.addr %s34, 4
          %s309 = sadd.s32 %s307, %s308
          %s310 = smul.addr %s309, 4
          %s311 = scalar_lea.hbm %s0, %s310
          %s313 = sshll.u32 %s311, 4
          %s314 = int_to_ptr.hbm [resolvable:$true] %s313
          %s315 = sshll.u32 %s304, 4
          %s316 = int_to_ptr.vmem [resolvable:$true] %s315
          %318 = dma.hbm_to_vmem [thread:$0]  %s314, 256, %s316, %s301
        $region36: #{tpu_custom_call.1} parent=31 // pred_fallthru
          _
        // Predicated region
        $region37: #{tpu_custom_call.1} parent=31 // pred_check
          %p319 = pneg %p89
        $region38: #{tpu_custom_call.1} parent=31 // pred_check_branch
          %321 = sbr.rel (%p319) target = $region40
        $region39: #{tpu_custom_call.1} parent=31 // pred_region
          %s322 = sand.u32 %s27, 1
          %s323 = scalar_lea.sflag [#allocation6], %s322
          %s324 = sand.u32 %s79, 1
          %s325 = smul.addr %s324, 16
          %s326 = scalar_lea.vmem [#allocation5], %s325
          %328 = vsyncadd %s323, 0
          %s329 = smul.addr %s35, 4
          %s330 = smul.addr %s34, 4
          %s331 = sadd.s32 %s329, %s330
          %s332 = smul.addr %s331, 4
          %s333 = scalar_lea.hbm %s1, %s332
          %s335 = sshll.u32 %s333, 4
          %s336 = int_to_ptr.hbm [resolvable:$true] %s335
          %s337 = sshll.u32 %s326, 4
          %s338 = int_to_ptr.vmem [resolvable:$true] %s337
          %340 = dma.hbm_to_vmem [thread:$0]  %s336, 256, %s338, %s323
        $region40: #{tpu_custom_call.1} parent=31 // pred_fallthru
          _
      $region32: #{tpu_custom_call.1} parent=5 // pred_fallthru
        _
      %p341 = scmp.le.s32.totalorder 1, %s27
      %p342 = scmp.lt.s32.totalorder %s27, 3
      %p343 = pnand %p341, %p342
      %p344 = pneg %p343
      // Predicated region
      $region41: #{tpu_custom_call.1} parent=5 // pred_check
        _
      $region42: #{tpu_custom_call.1} parent=5 // pred_check_branch
        %346 = sbr.rel (%p343) target = $region44
      $region43: #{tpu_custom_call.1} parent=5 // pred_region
        %s347 = ssub.s32 %s27, 1
        %s348 = sand.u32 %s54, 1
        %s349 = scalar_lea.sflag [#allocation3], %s348
        %s350 = sand.u32 %s54, 1
        %s351 = smul.addr %s350, 16
        %s352 = scalar_lea.vmem [#allocation2], %s351
        // Predicated region
        $region45: #{tpu_custom_call.1} parent=43 // pred_check
          %p353 = pneg %p67
        $region46: #{tpu_custom_call.1} parent=43 // pred_check_branch
          %355 = sbr.rel (%p353) target = $region48
        $region47: #{tpu_custom_call.1} parent=43 // pred_region
          %357 = dma.done %s349, 256
        $region48: #{tpu_custom_call.1} parent=43 // pred_fallthru
          _
        %s358 = sand.u32 %s32, 1
        %s359 = scalar_lea.sflag [#allocation6], %s358
        %s360 = sand.u32 %s82, 1
        %s361 = smul.addr %s360, 16
        %s362 = scalar_lea.vmem [#allocation5], %s361
        // Predicated region
        $region49: #{tpu_custom_call.1} parent=43 // pred_check
          %p363 = pneg %p95
        $region50: #{tpu_custom_call.1} parent=43 // pred_check_branch
          %365 = sbr.rel (%p363) target = $region52
        $region51: #{tpu_custom_call.1} parent=43 // pred_region
          %367 = dma.done %s359, 256
        $region52: #{tpu_custom_call.1} parent=43 // pred_fallthru
          _
        // Predicated region
        $region53: #{tpu_custom_call.1} parent=43 // pred_check
          %p368 = pneg %p116
        $region54: #{tpu_custom_call.1} parent=43 // pred_check_branch
          %370 = sbr.rel (%p368) target = $region56
        $region55: #{tpu_custom_call.1} parent=43 // pred_region
          %372 = dma.done [#allocation6], 16384
        $region56: #{tpu_custom_call.1} parent=43 // pred_fallthru
          _
        // Predicated region
        $region57: #{tpu_custom_call.1} parent=43 // pred_check
          %p373 = pneg %p137
        $region58: #{tpu_custom_call.1} parent=43 // pred_check_branch
          %375 = sbr.rel (%p373) target = $region60
        $region59: #{tpu_custom_call.1} parent=43 // pred_region
          %377 = dma.done [#allocation9], 64
        $region60: #{tpu_custom_call.1} parent=43 // pred_fallthru
          _
        // Predicated region
        $region61: #{tpu_custom_call.1} parent=43 // pred_check
          %p378 = pneg %p158
        $region62: #{tpu_custom_call.1} parent=43 // pred_check_branch
          %380 = sbr.rel (%p378) target = $region64
        $region63: #{tpu_custom_call.1} parent=43 // pred_region
          %382 = dma.done [#allocation9], 16384
        $region64: #{tpu_custom_call.1} parent=43 // pred_fallthru
          _
        %s383 = sand.u32 %s54, 1
        %s384 = scalar_lea.sflag [#allocation3], %s383
        %s385 = sand.u32 %s54, 1
        %s386 = smul.addr %s385, 16
        %s387 = scalar_lea.vmem [#allocation2], %s386
        %p388 = pneg %p67
        %p389 = pneg %p64
        %s390 = sand.u32 %s32, 1
        %s391 = scalar_lea.sflag [#allocation6], %s390
        %s392 = sand.u32 %s82, 1
        %s393 = smul.addr %s392, 16
        %s394 = scalar_lea.vmem [#allocation5], %s393
        %p395 = pneg %p95
        %p396 = pneg %p92
        %p397 = pneg %p116
        %p398 = pneg %p113
        %p399 = pneg %p137
        %p400 = pneg %p134
        %p401 = pneg %p158
        %p402 = pneg %p155
        %p403 = pneg %p179
        %p404 = pneg %p176
        %p405 = pneg %p207
        %p406 = pneg %p204
        %s407 = sand.u32 %s194, 1
        %s408 = scalar_lea.sflag [#allocation4], %s407
        %s409 = sand.u32 %s194, 1
        %s410 = smul.addr %s409, 16
        %s411 = scalar_lea.vmem [#allocation11], %s410
        %p412 = pneg %p235
        %p413 = pneg %p232
        %s414 = sand.u32 %s222, 1
        %s415 = scalar_lea.sflag [#allocation13], %s414
        %s416 = sand.u32 %s222, 1
        %s417 = smul.addr %s416, 16
        %s418 = scalar_lea.vmem [#allocation12], %s417
        %v419 = vld [vmem:[%s352] sm:$0xff]
        %v420 = vld [vmem:[%s352 + $0x8] sm:$0xff]
        %v421 = vld [vmem:[#allocation7] sm:$0xff]
        %v422 = vld [vmem:[#allocation7 + $0x8] sm:$0xff]
        %v423 = vld [vmem:[#allocation7 + $0x10] sm:$0xff]
        %v424 = vld [vmem:[#allocation7 + $0x18] sm:$0xff]
        %v425 = vld [vmem:[#allocation7 + $0x20] sm:$0xff]
        %v426 = vld [vmem:[#allocation7 + $0x28] sm:$0xff]
        %v427 = vld [vmem:[#allocation7 + $0x30] sm:$0xff]
        %v428 = vld [vmem:[#allocation7 + $0x38] sm:$0xff]
        %v429 = vld [vmem:[#allocation7 + $0x40] sm:$0xff]
        %v430 = vld [vmem:[#allocation7 + $0x48] sm:$0xff]
        %v431 = vld [vmem:[#allocation7 + $0x50] sm:$0xff]
        %v432 = vld [vmem:[#allocation7 + $0x58] sm:$0xff]
        %v433 = vld [vmem:[#allocation7 + $0x60] sm:$0xff]
        %v434 = vld [vmem:[#allocation7 + $0x68] sm:$0xff]
        %v435 = vld [vmem:[#allocation7 + $0x70] sm:$0xff]
        %v436 = vld [vmem:[#allocation7 + $0x78] sm:$0xff]
        %v437 = vld [vmem:[#allocation7 + $0x80] sm:$0xff]
        %v438 = vld [vmem:[#allocation7 + $0x88] sm:$0xff]
        %v439 = vld [vmem:[#allocation7 + $0x90] sm:$0xff]
        %v440 = vld [vmem:[#allocation7 + $0x98] sm:$0xff]
        %v441 = vld [vmem:[#allocation7 + $0xa0] sm:$0xff]
        %v442 = vld [vmem:[#allocation7 + $0xa8] sm:$0xff]
        %v443 = vld [vmem:[#allocation7 + $0xb0] sm:$0xff]
        %v444 = vld [vmem:[#allocation7 + $0xb8] sm:$0xff]
        %v445 = vld [vmem:[#allocation7 + $0xc0] sm:$0xff]
        %v446 = vld [vmem:[#allocation7 + $0xc8] sm:$0xff]
        %v447 = vld [vmem:[#allocation7 + $0xd0] sm:$0xff]
        %v448 = vld [vmem:[#allocation7 + $0xd8] sm:$0xff]
        %v449 = vld [vmem:[#allocation7 + $0xe0] sm:$0xff]
        %v450 = vld [vmem:[#allocation7 + $0xe8] sm:$0xff]
        %v451 = vld [vmem:[#allocation7 + $0xf0] sm:$0xff]
        %v452 = vld [vmem:[#allocation7 + $0xf8] sm:$0xff]
        %v453 = vld [vmem:[#allocation7 + $0x100] sm:$0xff]
        %v454 = vld [vmem:[#allocation7 + $0x108] sm:$0xff]
        %v455 = vld [vmem:[#allocation7 + $0x110] sm:$0xff]
        %v456 = vld [vmem:[#allocation7 + $0x118] sm:$0xff]
        %v457 = vld [vmem:[#allocation7 + $0x120] sm:$0xff]
        %v458 = vld [vmem:[#allocation7 + $0x128] sm:$0xff]
        %v459 = vld [vmem:[#allocation7 + $0x130] sm:$0xff]
        %v460 = vld [vmem:[#allocation7 + $0x138] sm:$0xff]
        %v461 = vld [vmem:[#allocation7 + $0x140] sm:$0xff]
        %v462 = vld [vmem:[#allocation7 + $0x148] sm:$0xff]
        %v463 = vld [vmem:[#allocation7 + $0x150] sm:$0xff]
        %v464 = vld [vmem:[#allocation7 + $0x158] sm:$0xff]
        %v465 = vld [vmem:[#allocation7 + $0x160] sm:$0xff]
        %v466 = vld [vmem:[#allocation7 + $0x168] sm:$0xff]
        %v467 = vld [vmem:[#allocation7 + $0x170] sm:$0xff]
        %v468 = vld [vmem:[#allocation7 + $0x178] sm:$0xff]
        %v469 = vld [vmem:[#allocation7 + $0x180] sm:$0xff]
        %v470 = vld [vmem:[#allocation7 + $0x188] sm:$0xff]
        %v471 = vld [vmem:[#allocation7 + $0x190] sm:$0xff]
        %v472 = vld [vmem:[#allocation7 + $0x198] sm:$0xff]
        %v473 = vld [vmem:[#allocation7 + $0x1a0] sm:$0xff]
        %v474 = vld [vmem:[#allocation7 + $0x1a8] sm:$0xff]
        %v475 = vld [vmem:[#allocation7 + $0x1b0] sm:$0xff]
        %v476 = vld [vmem:[#allocation7 + $0x1b8] sm:$0xff]
        %v477 = vld [vmem:[#allocation7 + $0x1c0] sm:$0xff]
        %v478 = vld [vmem:[#allocation7 + $0x1c8] sm:$0xff]
        %v479 = vld [vmem:[#allocation7 + $0x1d0] sm:$0xff]
        %v480 = vld [vmem:[#allocation7 + $0x1d8] sm:$0xff]
        %v481 = vld [vmem:[#allocation7 + $0x1e0] sm:$0xff]
        %v482 = vld [vmem:[#allocation7 + $0x1e8] sm:$0xff]
        %v483 = vld [vmem:[#allocation7 + $0x1f0] sm:$0xff]
        %v484 = vld [vmem:[#allocation7 + $0x1f8] sm:$0xff]
        %v485 = vld [vmem:[#allocation7 + $0x200] sm:$0xff]
        %v486 = vld [vmem:[#allocation7 + $0x208] sm:$0xff]
        %v487 = vld [vmem:[#allocation7 + $0x210] sm:$0xff]
        %v488 = vld [vmem:[#allocation7 + $0x218] sm:$0xff]
        %v489 = vld [vmem:[#allocation7 + $0x220] sm:$0xff]
        %v490 = vld [vmem:[#allocation7 + $0x228] sm:$0xff]
        %v491 = vld [vmem:[#allocation7 + $0x230] sm:$0xff]
        %v492 = vld [vmem:[#allocation7 + $0x238] sm:$0xff]
        %v493 = vld [vmem:[#allocation7 + $0x240] sm:$0xff]
        %v494 = vld [vmem:[#allocation7 + $0x248] sm:$0xff]
        %v495 = vld [vmem:[#allocation7 + $0x250] sm:$0xff]
        %v496 = vld [vmem:[#allocation7 + $0x258] sm:$0xff]
        %v497 = vld [vmem:[#allocation7 + $0x260] sm:$0xff]
        %v498 = vld [vmem:[#allocation7 + $0x268] sm:$0xff]
        %v499 = vld [vmem:[#allocation7 + $0x270] sm:$0xff]
        %v500 = vld [vmem:[#allocation7 + $0x278] sm:$0xff]
        %v501 = vld [vmem:[#allocation7 + $0x280] sm:$0xff]
        %v502 = vld [vmem:[#allocation7 + $0x288] sm:$0xff]
        %v503 = vld [vmem:[#allocation7 + $0x290] sm:$0xff]
        %v504 = vld [vmem:[#allocation7 + $0x298] sm:$0xff]
        %v505 = vld [vmem:[#allocation7 + $0x2a0] sm:$0xff]
        %v506 = vld [vmem:[#allocation7 + $0x2a8] sm:$0xff]
        %v507 = vld [vmem:[#allocation7 + $0x2b0] sm:$0xff]
        %v508 = vld [vmem:[#allocation7 + $0x2b8] sm:$0xff]
        %v509 = vld [vmem:[#allocation7 + $0x2c0] sm:$0xff]
        %v510 = vld [vmem:[#allocation7 + $0x2c8] sm:$0xff]
        %v511 = vld [vmem:[#allocation7 + $0x2d0] sm:$0xff]
        %v512 = vld [vmem:[#allocation7 + $0x2d8] sm:$0xff]
        %v513 = vld [vmem:[#allocation7 + $0x2e0] sm:$0xff]
        %v514 = vld [vmem:[#allocation7 + $0x2e8] sm:$0xff]
        %v515 = vld [vmem:[#allocation7 + $0x2f0] sm:$0xff]
        %v516 = vld [vmem:[#allocation7 + $0x2f8] sm:$0xff]
        %v517 = vld [vmem:[#allocation7 + $0x300] sm:$0xff]
        %v518 = vld [vmem:[#allocation7 + $0x308] sm:$0xff]
        %v519 = vld [vmem:[#allocation7 + $0x310] sm:$0xff]
        %v520 = vld [vmem:[#allocation7 + $0x318] sm:$0xff]
        %v521 = vld [vmem:[#allocation7 + $0x320] sm:$0xff]
        %v522 = vld [vmem:[#allocation7 + $0x328] sm:$0xff]
        %v523 = vld [vmem:[#allocation7 + $0x330] sm:$0xff]
        %v524 = vld [vmem:[#allocation7 + $0x338] sm:$0xff]
        %v525 = vld [vmem:[#allocation7 + $0x340] sm:$0xff]
        %v526 = vld [vmem:[#allocation7 + $0x348] sm:$0xff]
        %v527 = vld [vmem:[#allocation7 + $0x350] sm:$0xff]
        %v528 = vld [vmem:[#allocation7 + $0x358] sm:$0xff]
        %v529 = vld [vmem:[#allocation7 + $0x360] sm:$0xff]
        %v530 = vld [vmem:[#allocation7 + $0x368] sm:$0xff]
        %v531 = vld [vmem:[#allocation7 + $0x370] sm:$0xff]
        %v532 = vld [vmem:[#allocation7 + $0x378] sm:$0xff]
        %v533 = vld [vmem:[#allocation7 + $0x380] sm:$0xff]
        %v534 = vld [vmem:[#allocation7 + $0x388] sm:$0xff]
        %v535 = vld [vmem:[#allocation7 + $0x390] sm:$0xff]
        %v536 = vld [vmem:[#allocation7 + $0x398] sm:$0xff]
        %v537 = vld [vmem:[#allocation7 + $0x3a0] sm:$0xff]
        %v538 = vld [vmem:[#allocation7 + $0x3a8] sm:$0xff]
        %v539 = vld [vmem:[#allocation7 + $0x3b0] sm:$0xff]
        %v540 = vld [vmem:[#allocation7 + $0x3b8] sm:$0xff]
        %v541 = vld [vmem:[#allocation7 + $0x3c0] sm:$0xff]
        %v542 = vld [vmem:[#allocation7 + $0x3c8] sm:$0xff]
        %v543 = vld [vmem:[#allocation7 + $0x3d0] sm:$0xff]
        %v544 = vld [vmem:[#allocation7 + $0x3d8] sm:$0xff]
        %v545 = vld [vmem:[#allocation7 + $0x3e0] sm:$0xff]
        %v546 = vld [vmem:[#allocation7 + $0x3e8] sm:$0xff]
        %v547 = vld [vmem:[#allocation7 + $0x3f0] sm:$0xff]
        %v548 = vld [vmem:[#allocation7 + $0x3f8] sm:$0xff]
        %v549 = vld [vmem:[#allocation8] sm:$0xf]
        %v551 = vperm.slane %v549, 0
        %v552 = vperm.slane %v549, 1
        %v553 = vperm.slane %v549, 2
        %v554 = vperm.slane %v549, 3
        %v561 = vunpack.c.l.b16 %v419
        %v562 = vunpack.c.h.b16 %v419
        %v563 = vunpack.c.l.b16 %v420
        %v564 = vunpack.c.h.b16 %v420
        %v565 = vpack.c.b16 %v561, %v561
        %v566 = vpack.c.b16 %v562, %v562
        %v567 = vpack.c.b16 %v563, %v563
        %v568 = vpack.c.b16 %v564, %v564
        %v701 = vunpack.c.l.b16 %v421
        %v702 = vunpack.c.h.b16 %v421
        %v703 = vunpack.c.l.b16 %v422
        %v704 = vunpack.c.h.b16 %v422
        %v705 = vunpack.c.l.b16 %v423
        %v706 = vunpack.c.h.b16 %v423
        %v707 = vunpack.c.l.b16 %v424
        %v708 = vunpack.c.h.b16 %v424
        %v709 = vunpack.c.l.b16 %v425
        %v710 = vunpack.c.h.b16 %v425
        %v711 = vunpack.c.l.b16 %v426
        %v712 = vunpack.c.h.b16 %v426
        %v713 = vunpack.c.l.b16 %v427
        %v714 = vunpack.c.h.b16 %v427
        %v715 = vunpack.c.l.b16 %v428
        %v716 = vunpack.c.h.b16 %v428
        %v717 = vunpack.c.l.b16 %v429
        %v718 = vunpack.c.h.b16 %v429
        %v719 = vunpack.c.l.b16 %v430
        %v720 = vunpack.c.h.b16 %v430
        %v721 = vunpack.c.l.b16 %v431
        %v722 = vunpack.c.h.b16 %v431
        %v723 = vunpack.c.l.b16 %v432
        %v724 = vunpack.c.h.b16 %v432
        %v725 = vunpack.c.l.b16 %v433
        %v726 = vunpack.c.h.b16 %v433
        %v727 = vunpack.c.l.b16 %v434
        %v728 = vunpack.c.h.b16 %v434
        %v729 = vunpack.c.l.b16 %v435
        %v730 = vunpack.c.h.b16 %v435
        %v731 = vunpack.c.l.b16 %v436
        %v732 = vunpack.c.h.b16 %v436
        %v733 = vunpack.c.l.b16 %v437
        %v734 = vunpack.c.h.b16 %v437
        %v735 = vunpack.c.l.b16 %v438
        %v736 = vunpack.c.h.b16 %v438
        %v737 = vunpack.c.l.b16 %v439
        %v738 = vunpack.c.h.b16 %v439
        %v739 = vunpack.c.l.b16 %v440
        %v740 = vunpack.c.h.b16 %v440
        %v741 = vunpack.c.l.b16 %v441
        %v742 = vunpack.c.h.b16 %v441
        %v743 = vunpack.c.l.b16 %v442
        %v744 = vunpack.c.h.b16 %v442
        %v745 = vunpack.c.l.b16 %v443
        %v746 = vunpack.c.h.b16 %v443
        %v747 = vunpack.c.l.b16 %v444
        %v748 = vunpack.c.h.b16 %v444
        %v749 = vunpack.c.l.b16 %v445
        %v750 = vunpack.c.h.b16 %v445
        %v751 = vunpack.c.l.b16 %v446
        %v752 = vunpack.c.h.b16 %v446
        %v753 = vunpack.c.l.b16 %v447
        %v754 = vunpack.c.h.b16 %v447
        %v755 = vunpack.c.l.b16 %v448
        %v756 = vunpack.c.h.b16 %v448
        %v757 = vunpack.c.l.b16 %v449
        %v758 = vunpack.c.h.b16 %v449
        %v759 = vunpack.c.l.b16 %v450
        %v760 = vunpack.c.h.b16 %v450
        %v761 = vunpack.c.l.b16 %v451
        %v762 = vunpack.c.h.b16 %v451
        %v763 = vunpack.c.l.b16 %v452
        %v764 = vunpack.c.h.b16 %v452
        %v765 = vunpack.c.l.b16 %v453
        %v766 = vunpack.c.h.b16 %v453
        %v767 = vunpack.c.l.b16 %v454
        %v768 = vunpack.c.h.b16 %v454
        %v769 = vunpack.c.l.b16 %v455
        %v770 = vunpack.c.h.b16 %v455
        %v771 = vunpack.c.l.b16 %v456
        %v772 = vunpack.c.h.b16 %v456
        %v773 = vunpack.c.l.b16 %v457
        %v774 = vunpack.c.h.b16 %v457
        %v775 = vunpack.c.l.b16 %v458
        %v776 = vunpack.c.h.b16 %v458
        %v777 = vunpack.c.l.b16 %v459
        %v778 = vunpack.c.h.b16 %v459
        %v779 = vunpack.c.l.b16 %v460
        %v780 = vunpack.c.h.b16 %v460
        %v781 = vunpack.c.l.b16 %v461
        %v782 = vunpack.c.h.b16 %v461
        %v783 = vunpack.c.l.b16 %v462
        %v784 = vunpack.c.h.b16 %v462
        %v785 = vunpack.c.l.b16 %v463
        %v786 = vunpack.c.h.b16 %v463
        %v787 = vunpack.c.l.b16 %v464
        %v788 = vunpack.c.h.b16 %v464
        %v789 = vunpack.c.l.b16 %v465
        %v790 = vunpack.c.h.b16 %v465
        %v791 = vunpack.c.l.b16 %v466
        %v792 = vunpack.c.h.b16 %v466
        %v793 = vunpack.c.l.b16 %v467
        %v794 = vunpack.c.h.b16 %v467
        %v795 = vunpack.c.l.b16 %v468
        %v796 = vunpack.c.h.b16 %v468
        %v797 = vunpack.c.l.b16 %v469
        %v798 = vunpack.c.h.b16 %v469
        %v799 = vunpack.c.l.b16 %v470
        %v800 = vunpack.c.h.b16 %v470
        %v801 = vunpack.c.l.b16 %v471
        %v802 = vunpack.c.h.b16 %v471
        %v803 = vunpack.c.l.b16 %v472
        %v804 = vunpack.c.h.b16 %v472
        %v805 = vunpack.c.l.b16 %v473
        %v806 = vunpack.c.h.b16 %v473
        %v807 = vunpack.c.l.b16 %v474
        %v808 = vunpack.c.h.b16 %v474
        %v809 = vunpack.c.l.b16 %v475
        %v810 = vunpack.c.h.b16 %v475
        %v811 = vunpack.c.l.b16 %v476
        %v812 = vunpack.c.h.b16 %v476
        %v813 = vunpack.c.l.b16 %v477
        %v814 = vunpack.c.h.b16 %v477
        %v815 = vunpack.c.l.b16 %v478
        %v816 = vunpack.c.h.b16 %v478
        %v817 = vunpack.c.l.b16 %v479
        %v818 = vunpack.c.h.b16 %v479
        %v819 = vunpack.c.l.b16 %v480
        %v820 = vunpack.c.h.b16 %v480
        %v821 = vunpack.c.l.b16 %v481
        %v822 = vunpack.c.h.b16 %v481
        %v823 = vunpack.c.l.b16 %v482
        %v824 = vunpack.c.h.b16 %v482
        %v825 = vunpack.c.l.b16 %v483
        %v826 = vunpack.c.h.b16 %v483
        %v827 = vunpack.c.l.b16 %v484
        %v828 = vunpack.c.h.b16 %v484
        %v829 = vunpack.c.l.b16 %v485
        %v830 = vunpack.c.h.b16 %v485
        %v831 = vunpack.c.l.b16 %v486
        %v832 = vunpack.c.h.b16 %v486
        %v833 = vunpack.c.l.b16 %v487
        %v834 = vunpack.c.h.b16 %v487
        %v835 = vunpack.c.l.b16 %v488
        %v836 = vunpack.c.h.b16 %v488
        %v837 = vunpack.c.l.b16 %v489
        %v838 = vunpack.c.h.b16 %v489
        %v839 = vunpack.c.l.b16 %v490
        %v840 = vunpack.c.h.b16 %v490
        %v841 = vunpack.c.l.b16 %v491
        %v842 = vunpack.c.h.b16 %v491
        %v843 = vunpack.c.l.b16 %v492
        %v844 = vunpack.c.h.b16 %v492
        %v845 = vunpack.c.l.b16 %v493
        %v846 = vunpack.c.h.b16 %v493
        %v847 = vunpack.c.l.b16 %v494
        %v848 = vunpack.c.h.b16 %v494
        %v849 = vunpack.c.l.b16 %v495
        %v850 = vunpack.c.h.b16 %v495
        %v851 = vunpack.c.l.b16 %v496
        %v852 = vunpack.c.h.b16 %v496
        %v853 = vunpack.c.l.b16 %v497
        %v854 = vunpack.c.h.b16 %v497
        %v855 = vunpack.c.l.b16 %v498
        %v856 = vunpack.c.h.b16 %v498
        %v857 = vunpack.c.l.b16 %v499
        %v858 = vunpack.c.h.b16 %v499
        %v859 = vunpack.c.l.b16 %v500
        %v860 = vunpack.c.h.b16 %v500
        %v861 = vunpack.c.l.b16 %v501
        %v862 = vunpack.c.h.b16 %v501
        %v863 = vunpack.c.l.b16 %v502
        %v864 = vunpack.c.h.b16 %v502
        %v865 = vunpack.c.l.b16 %v503
        %v866 = vunpack.c.h.b16 %v503
        %v867 = vunpack.c.l.b16 %v504
        %v868 = vunpack.c.h.b16 %v504
        %v869 = vunpack.c.l.b16 %v505
        %v870 = vunpack.c.h.b16 %v505
        %v871 = vunpack.c.l.b16 %v506
        %v872 = vunpack.c.h.b16 %v506
        %v873 = vunpack.c.l.b16 %v507
        %v874 = vunpack.c.h.b16 %v507
        %v875 = vunpack.c.l.b16 %v508
        %v876 = vunpack.c.h.b16 %v508
        %v877 = vunpack.c.l.b16 %v509
        %v878 = vunpack.c.h.b16 %v509
        %v879 = vunpack.c.l.b16 %v510
        %v880 = vunpack.c.h.b16 %v510
        %v881 = vunpack.c.l.b16 %v511
        %v882 = vunpack.c.h.b16 %v511
        %v883 = vunpack.c.l.b16 %v512
        %v884 = vunpack.c.h.b16 %v512
        %v885 = vunpack.c.l.b16 %v513
        %v886 = vunpack.c.h.b16 %v513
        %v887 = vunpack.c.l.b16 %v514
        %v888 = vunpack.c.h.b16 %v514
        %v889 = vunpack.c.l.b16 %v515
        %v890 = vunpack.c.h.b16 %v515
        %v891 = vunpack.c.l.b16 %v516
        %v892 = vunpack.c.h.b16 %v516
        %v893 = vunpack.c.l.b16 %v517
        %v894 = vunpack.c.h.b16 %v517
        %v895 = vunpack.c.l.b16 %v518
        %v896 = vunpack.c.h.b16 %v518
        %v897 = vunpack.c.l.b16 %v519
        %v898 = vunpack.c.h.b16 %v519
        %v899 = vunpack.c.l.b16 %v520
        %v900 = vunpack.c.h.b16 %v520
        %v901 = vunpack.c.l.b16 %v521
        %v902 = vunpack.c.h.b16 %v521
        %v903 = vunpack.c.l.b16 %v522
        %v904 = vunpack.c.h.b16 %v522
        %v905 = vunpack.c.l.b16 %v523
        %v906 = vunpack.c.h.b16 %v523
        %v907 = vunpack.c.l.b16 %v524
        %v908 = vunpack.c.h.b16 %v524
        %v909 = vunpack.c.l.b16 %v525
        %v910 = vunpack.c.h.b16 %v525
        %v911 = vunpack.c.l.b16 %v526
        %v912 = vunpack.c.h.b16 %v526
        %v913 = vunpack.c.l.b16 %v527
        %v914 = vunpack.c.h.b16 %v527
        %v915 = vunpack.c.l.b16 %v528
        %v916 = vunpack.c.h.b16 %v528
        %v917 = vunpack.c.l.b16 %v529
        %v918 = vunpack.c.h.b16 %v529
        %v919 = vunpack.c.l.b16 %v530
        %v920 = vunpack.c.h.b16 %v530
        %v921 = vunpack.c.l.b16 %v531
        %v922 = vunpack.c.h.b16 %v531
        %v923 = vunpack.c.l.b16 %v532
        %v924 = vunpack.c.h.b16 %v532
        %v925 = vunpack.c.l.b16 %v533
        %v926 = vunpack.c.h.b16 %v533
        %v927 = vunpack.c.l.b16 %v534
        %v928 = vunpack.c.h.b16 %v534
        %v929 = vunpack.c.l.b16 %v535
        %v930 = vunpack.c.h.b16 %v535
        %v931 = vunpack.c.l.b16 %v536
        %v932 = vunpack.c.h.b16 %v536
        %v933 = vunpack.c.l.b16 %v537
        %v934 = vunpack.c.h.b16 %v537
        %v935 = vunpack.c.l.b16 %v538
        %v936 = vunpack.c.h.b16 %v538
        %v937 = vunpack.c.l.b16 %v539
        %v938 = vunpack.c.h.b16 %v539
        %v939 = vunpack.c.l.b16 %v540
        %v940 = vunpack.c.h.b16 %v540
        %v941 = vunpack.c.l.b16 %v541
        %v942 = vunpack.c.h.b16 %v541
        %v943 = vunpack.c.l.b16 %v542
        %v944 = vunpack.c.h.b16 %v542
        %v945 = vunpack.c.l.b16 %v543
        %v946 = vunpack.c.h.b16 %v543
        %v947 = vunpack.c.l.b16 %v544
        %v948 = vunpack.c.h.b16 %v544
        %v949 = vunpack.c.l.b16 %v545
        %v950 = vunpack.c.h.b16 %v545
        %v951 = vunpack.c.l.b16 %v546
        %v952 = vunpack.c.h.b16 %v546
        %v953 = vunpack.c.l.b16 %v547
        %v954 = vunpack.c.h.b16 %v547
        %v955 = vunpack.c.l.b16 %v548
        %v956 = vunpack.c.h.b16 %v548
        %v957 = vpack.c.b16 %v705, %v701
        %v958 = vpack.c.b16 %v706, %v702
        %v959 = vpack.c.b16 %v707, %v703
        %v960 = vpack.c.b16 %v708, %v704
        %v961 = vpack.c.b16 %v713, %v709
        %v962 = vpack.c.b16 %v714, %v710
        %v963 = vpack.c.b16 %v715, %v711
        %v964 = vpack.c.b16 %v716, %v712
        %v965 = vpack.c.b16 %v721, %v717
        %v966 = vpack.c.b16 %v722, %v718
        %v967 = vpack.c.b16 %v723, %v719
        %v968 = vpack.c.b16 %v724, %v720
        %v969 = vpack.c.b16 %v729, %v725
        %v970 = vpack.c.b16 %v730, %v726
        %v971 = vpack.c.b16 %v731, %v727
        %v972 = vpack.c.b16 %v732, %v728
        %v973 = vpack.c.b16 %v737, %v733
        %v974 = vpack.c.b16 %v738, %v734
        %v975 = vpack.c.b16 %v739, %v735
        %v976 = vpack.c.b16 %v740, %v736
        %v977 = vpack.c.b16 %v745, %v741
        %v978 = vpack.c.b16 %v746, %v742
        %v979 = vpack.c.b16 %v747, %v743
        %v980 = vpack.c.b16 %v748, %v744
        %v981 = vpack.c.b16 %v753, %v749
        %v982 = vpack.c.b16 %v754, %v750
        %v983 = vpack.c.b16 %v755, %v751
        %v984 = vpack.c.b16 %v756, %v752
        %v985 = vpack.c.b16 %v761, %v757
        %v986 = vpack.c.b16 %v762, %v758
        %v987 = vpack.c.b16 %v763, %v759
        %v988 = vpack.c.b16 %v764, %v760
        %v989 = vpack.c.b16 %v769, %v765
        %v990 = vpack.c.b16 %v770, %v766
        %v991 = vpack.c.b16 %v771, %v767
        %v992 = vpack.c.b16 %v772, %v768
        %v993 = vpack.c.b16 %v777, %v773
        %v994 = vpack.c.b16 %v778, %v774
        %v995 = vpack.c.b16 %v779, %v775
        %v996 = vpack.c.b16 %v780, %v776
        %v997 = vpack.c.b16 %v785, %v781
        %v998 = vpack.c.b16 %v786, %v782
        %v999 = vpack.c.b16 %v787, %v783
        %v1000 = vpack.c.b16 %v788, %v784
        %v1001 = vpack.c.b16 %v793, %v789
        %v1002 = vpack.c.b16 %v794, %v790
        %v1003 = vpack.c.b16 %v795, %v791
        %v1004 = vpack.c.b16 %v796, %v792
        %v1005 = vpack.c.b16 %v801, %v797
        %v1006 = vpack.c.b16 %v802, %v798
        %v1007 = vpack.c.b16 %v803, %v799
        %v1008 = vpack.c.b16 %v804, %v800
        %v1009 = vpack.c.b16 %v809, %v805
        %v1010 = vpack.c.b16 %v810, %v806
        %v1011 = vpack.c.b16 %v811, %v807
        %v1012 = vpack.c.b16 %v812, %v808
        %v1013 = vpack.c.b16 %v817, %v813
        %v1014 = vpack.c.b16 %v818, %v814
        %v1015 = vpack.c.b16 %v819, %v815
        %v1016 = vpack.c.b16 %v820, %v816
        %v1017 = vpack.c.b16 %v825, %v821
        %v1018 = vpack.c.b16 %v826, %v822
        %v1019 = vpack.c.b16 %v827, %v823
        %v1020 = vpack.c.b16 %v828, %v824
        %v1021 = vpack.c.b16 %v833, %v829
        %v1022 = vpack.c.b16 %v834, %v830
        %v1023 = vpack.c.b16 %v835, %v831
        %v1024 = vpack.c.b16 %v836, %v832
        %v1025 = vpack.c.b16 %v841, %v837
        %v1026 = vpack.c.b16 %v842, %v838
        %v1027 = vpack.c.b16 %v843, %v839
        %v1028 = vpack.c.b16 %v844, %v840
        %v1029 = vpack.c.b16 %v849, %v845
        %v1030 = vpack.c.b16 %v850, %v846
        %v1031 = vpack.c.b16 %v851, %v847
        %v1032 = vpack.c.b16 %v852, %v848
        %v1033 = vpack.c.b16 %v857, %v853
        %v1034 = vpack.c.b16 %v858, %v854
        %v1035 = vpack.c.b16 %v859, %v855
        %v1036 = vpack.c.b16 %v860, %v856
        %v1037 = vpack.c.b16 %v865, %v861
        %v1038 = vpack.c.b16 %v866, %v862
        %v1039 = vpack.c.b16 %v867, %v863
        %v1040 = vpack.c.b16 %v868, %v864
        %v1041 = vpack.c.b16 %v873, %v869
        %v1042 = vpack.c.b16 %v874, %v870
        %v1043 = vpack.c.b16 %v875, %v871
        %v1044 = vpack.c.b16 %v876, %v872
        %v1045 = vpack.c.b16 %v881, %v877
        %v1046 = vpack.c.b16 %v882, %v878
        %v1047 = vpack.c.b16 %v883, %v879
        %v1048 = vpack.c.b16 %v884, %v880
        %v1049 = vpack.c.b16 %v889, %v885
        %v1050 = vpack.c.b16 %v890, %v886
        %v1051 = vpack.c.b16 %v891, %v887
        %v1052 = vpack.c.b16 %v892, %v888
        %v1053 = vpack.c.b16 %v897, %v893
        %v1054 = vpack.c.b16 %v898, %v894
        %v1055 = vpack.c.b16 %v899, %v895
        %v1056 = vpack.c.b16 %v900, %v896
        %v1057 = vpack.c.b16 %v905, %v901
        %v1058 = vpack.c.b16 %v906, %v902
        %v1059 = vpack.c.b16 %v907, %v903
        %v1060 = vpack.c.b16 %v908, %v904
        %v1061 = vpack.c.b16 %v913, %v909
        %v1062 = vpack.c.b16 %v914, %v910
        %v1063 = vpack.c.b16 %v915, %v911
        %v1064 = vpack.c.b16 %v916, %v912
        %v1065 = vpack.c.b16 %v921, %v917
        %v1066 = vpack.c.b16 %v922, %v918
        %v1067 = vpack.c.b16 %v923, %v919
        %v1068 = vpack.c.b16 %v924, %v920
        %v1069 = vpack.c.b16 %v929, %v925
        %v1070 = vpack.c.b16 %v930, %v926
        %v1071 = vpack.c.b16 %v931, %v927
        %v1072 = vpack.c.b16 %v932, %v928
        %v1073 = vpack.c.b16 %v937, %v933
        %v1074 = vpack.c.b16 %v938, %v934
        %v1075 = vpack.c.b16 %v939, %v935
        %v1076 = vpack.c.b16 %v940, %v936
        %v1077 = vpack.c.b16 %v945, %v941
        %v1078 = vpack.c.b16 %v946, %v942
        %v1079 = vpack.c.b16 %v947, %v943
        %v1080 = vpack.c.b16 %v948, %v944
        %v1081 = vpack.c.b16 %v953, %v949
        %v1082 = vpack.c.b16 %v954, %v950
        %v1083 = vpack.c.b16 %v955, %v951
        %v1084 = vpack.c.b16 %v956, %v952
        %1213 = vmatpush.bf16.msra.mxu0 %v985
        %1214 = vmatpush.bf16.msra.mxu0 %v981
        %1215 = vmatpush.bf16.msra.mxu0 %v977
        %1216 = vmatpush.bf16.msra.mxu0 %v973
        %1217 = vmatpush.bf16.msra.mxu0 %v969
        %1218 = vmatpush.bf16.msra.mxu0 %v965
        %1219 = vmatpush.bf16.msra.mxu0 %v961
        %1220 = vmatpush.bf16.msra.mxu0 %v957
        %1221 = vmatmul.bf16.gmra.mxu0 %v565
        %v1222 = vpop.f32.mrf.mxu0
        %v1223 = vadd.f32 %v551, %v1222
        %v1224 = vpop.f32.mrf.mxu0
        %1225 = vdwg.mxu0
        %1226 = vmatpush.bf16.msra.mxu0 %v1017
        %1227 = vmatpush.bf16.msra.mxu0 %v1013
        %1228 = vmatpush.bf16.msra.mxu0 %v1009
        %1229 = vmatpush.bf16.msra.mxu0 %v1005
        %1230 = vmatpush.bf16.msra.mxu0 %v1001
        %1231 = vmatpush.bf16.msra.mxu0 %v997
        %1232 = vmatpush.bf16.msra.mxu0 %v993
        %1233 = vmatpush.bf16.msra.mxu0 %v989
        %1234 = vmatmul.bf16.gmra.mxu0 %v566
        %v1235 = vpop.f32.mrf.mxu0
        %v1236 = vadd.f32 %v1223, %v1235
        %v1237 = vpop.f32.mrf.mxu0
        %1238 = vdwg.mxu0
        %1239 = vmatpush.bf16.msra.mxu0 %v1049
        %1240 = vmatpush.bf16.msra.mxu0 %v1045
        %1241 = vmatpush.bf16.msra.mxu0 %v1041
        %1242 = vmatpush.bf16.msra.mxu0 %v1037
        %1243 = vmatpush.bf16.msra.mxu0 %v1033
        %1244 = vmatpush.bf16.msra.mxu0 %v1029
        %1245 = vmatpush.bf16.msra.mxu0 %v1025
        %1246 = vmatpush.bf16.msra.mxu0 %v1021
        %1247 = vmatmul.bf16.gmra.mxu0 %v567
        %v1248 = vpop.f32.mrf.mxu0
        %v1249 = vadd.f32 %v1236, %v1248
        %v1250 = vpop.f32.mrf.mxu0
        %1251 = vdwg.mxu0
        %1252 = vmatpush.bf16.msra.mxu0 %v1081
        %1253 = vmatpush.bf16.msra.mxu0 %v1077
        %1254 = vmatpush.bf16.msra.mxu0 %v1073
        %1255 = vmatpush.bf16.msra.mxu0 %v1069
        %1256 = vmatpush.bf16.msra.mxu0 %v1065
        %1257 = vmatpush.bf16.msra.mxu0 %v1061
        %1258 = vmatpush.bf16.msra.mxu0 %v1057
        %1259 = vmatpush.bf16.msra.mxu0 %v1053
        %1260 = vmatmul.bf16.gmra.mxu0 %v568
        %v1261 = vpop.f32.mrf.mxu0
        %v1262 = vadd.f32 %v1249, %v1261
        %v1263 = vpop.f32.mrf.mxu0
        %1264 = vdwg.mxu0
        %1265 = vmatpush.bf16.msra.mxu0 %v986
        %1266 = vmatpush.bf16.msra.mxu0 %v982
        %1267 = vmatpush.bf16.msra.mxu0 %v978
        %1268 = vmatpush.bf16.msra.mxu0 %v974
        %1269 = vmatpush.bf16.msra.mxu0 %v970
        %1270 = vmatpush.bf16.msra.mxu0 %v966
        %1271 = vmatpush.bf16.msra.mxu0 %v962
        %1272 = vmatpush.bf16.msra.mxu0 %v958
        %1273 = vmatmul.bf16.gmra.mxu0 %v565
        %v1274 = vpop.f32.mrf.mxu0
        %v1275 = vadd.f32 %v552, %v1274
        %v1276 = vpop.f32.mrf.mxu0
        %1277 = vdwg.mxu0
        %1278 = vmatpush.bf16.msra.mxu0 %v1018
        %1279 = vmatpush.bf16.msra.mxu0 %v1014
        %1280 = vmatpush.bf16.msra.mxu0 %v1010
        %1281 = vmatpush.bf16.msra.mxu0 %v1006
        %1282 = vmatpush.bf16.msra.mxu0 %v1002
        %1283 = vmatpush.bf16.msra.mxu0 %v998
        %1284 = vmatpush.bf16.msra.mxu0 %v994
        %1285 = vmatpush.bf16.msra.mxu0 %v990
        %1286 = vmatmul.bf16.gmra.mxu0 %v566
        %v1287 = vpop.f32.mrf.mxu0
        %v1288 = vadd.f32 %v1275, %v1287
        %v1289 = vpop.f32.mrf.mxu0
        %1290 = vdwg.mxu0
        %1291 = vmatpush.bf16.msra.mxu0 %v1050
        %1292 = vmatpush.bf16.msra.mxu0 %v1046
        %1293 = vmatpush.bf16.msra.mxu0 %v1042
        %1294 = vmatpush.bf16.msra.mxu0 %v1038
        %1295 = vmatpush.bf16.msra.mxu0 %v1034
        %1296 = vmatpush.bf16.msra.mxu0 %v1030
        %1297 = vmatpush.bf16.msra.mxu0 %v1026
        %1298 = vmatpush.bf16.msra.mxu0 %v1022
        %1299 = vmatmul.bf16.gmra.mxu0 %v567
        %v1300 = vpop.f32.mrf.mxu0
        %v1301 = vadd.f32 %v1288, %v1300
        %v1302 = vpop.f32.mrf.mxu0
        %1303 = vdwg.mxu0
        %1304 = vmatpush.bf16.msra.mxu0 %v1082
        %1305 = vmatpush.bf16.msra.mxu0 %v1078
        %1306 = vmatpush.bf16.msra.mxu0 %v1074
        %1307 = vmatpush.bf16.msra.mxu0 %v1070
        %1308 = vmatpush.bf16.msra.mxu0 %v1066
        %1309 = vmatpush.bf16.msra.mxu0 %v1062
        %1310 = vmatpush.bf16.msra.mxu0 %v1058
        %1311 = vmatpush.bf16.msra.mxu0 %v1054
        %1312 = vmatmul.bf16.gmra.mxu0 %v568
        %v1313 = vpop.f32.mrf.mxu0
        %v1314 = vadd.f32 %v1301, %v1313
        %v1315 = vpop.f32.mrf.mxu0
        %1316 = vdwg.mxu0
        %1317 = vmatpush.bf16.msra.mxu0 %v987
        %1318 = vmatpush.bf16.msra.mxu0 %v983
        %1319 = vmatpush.bf16.msra.mxu0 %v979
        %1320 = vmatpush.bf16.msra.mxu0 %v975
        %1321 = vmatpush.bf16.msra.mxu0 %v971
        %1322 = vmatpush.bf16.msra.mxu0 %v967
        %1323 = vmatpush.bf16.msra.mxu0 %v963
        %1324 = vmatpush.bf16.msra.mxu0 %v959
        %1325 = vmatmul.bf16.gmra.mxu0 %v565
        %v1326 = vpop.f32.mrf.mxu0
        %v1327 = vadd.f32 %v553, %v1326
        %v1328 = vpop.f32.mrf.mxu0
        %1329 = vdwg.mxu0
        %1330 = vmatpush.bf16.msra.mxu0 %v1019
        %1331 = vmatpush.bf16.msra.mxu0 %v1015
        %1332 = vmatpush.bf16.msra.mxu0 %v1011
        %1333 = vmatpush.bf16.msra.mxu0 %v1007
        %1334 = vmatpush.bf16.msra.mxu0 %v1003
        %1335 = vmatpush.bf16.msra.mxu0 %v999
        %1336 = vmatpush.bf16.msra.mxu0 %v995
        %1337 = vmatpush.bf16.msra.mxu0 %v991
        %1338 = vmatmul.bf16.gmra.mxu0 %v566
        %v1339 = vpop.f32.mrf.mxu0
        %v1340 = vadd.f32 %v1327, %v1339
        %v1341 = vpop.f32.mrf.mxu0
        %1342 = vdwg.mxu0
        %1343 = vmatpush.bf16.msra.mxu0 %v1051
        %1344 = vmatpush.bf16.msra.mxu0 %v1047
        %1345 = vmatpush.bf16.msra.mxu0 %v1043
        %1346 = vmatpush.bf16.msra.mxu0 %v1039
        %1347 = vmatpush.bf16.msra.mxu0 %v1035
        %1348 = vmatpush.bf16.msra.mxu0 %v1031
        %1349 = vmatpush.bf16.msra.mxu0 %v1027
        %1350 = vmatpush.bf16.msra.mxu0 %v1023
        %1351 = vmatmul.bf16.gmra.mxu0 %v567
        %v1352 = vpop.f32.mrf.mxu0
        %v1353 = vadd.f32 %v1340, %v1352
        %v1354 = vpop.f32.mrf.mxu0
        %1355 = vdwg.mxu0
        %1356 = vmatpush.bf16.msra.mxu0 %v1083
        %1357 = vmatpush.bf16.msra.mxu0 %v1079
        %1358 = vmatpush.bf16.msra.mxu0 %v1075
        %1359 = vmatpush.bf16.msra.mxu0 %v1071
        %1360 = vmatpush.bf16.msra.mxu0 %v1067
        %1361 = vmatpush.bf16.msra.mxu0 %v1063
        %1362 = vmatpush.bf16.msra.mxu0 %v1059
        %1363 = vmatpush.bf16.msra.mxu0 %v1055
        %1364 = vmatmul.bf16.gmra.mxu0 %v568
        %v1365 = vpop.f32.mrf.mxu0
        %v1366 = vadd.f32 %v1353, %v1365
        %v1367 = vpop.f32.mrf.mxu0
        %1368 = vdwg.mxu0
        %1369 = vmatpush.bf16.msra.mxu0 %v988
        %1370 = vmatpush.bf16.msra.mxu0 %v984
        %1371 = vmatpush.bf16.msra.mxu0 %v980
        %1372 = vmatpush.bf16.msra.mxu0 %v976
        %1373 = vmatpush.bf16.msra.mxu0 %v972
        %1374 = vmatpush.bf16.msra.mxu0 %v968
        %1375 = vmatpush.bf16.msra.mxu0 %v964
        %1376 = vmatpush.bf16.msra.mxu0 %v960
        %1377 = vmatmul.bf16.gmra.mxu0 %v565
        %v1378 = vpop.f32.mrf.mxu0
        %v1379 = vadd.f32 %v554, %v1378
        %v1380 = vpop.f32.mrf.mxu0
        %1381 = vdwg.mxu0
        %1382 = vmatpush.bf16.msra.mxu0 %v1020
        %1383 = vmatpush.bf16.msra.mxu0 %v1016
        %1384 = vmatpush.bf16.msra.mxu0 %v1012
        %1385 = vmatpush.bf16.msra.mxu0 %v1008
        %1386 = vmatpush.bf16.msra.mxu0 %v1004
        %1387 = vmatpush.bf16.msra.mxu0 %v1000
        %1388 = vmatpush.bf16.msra.mxu0 %v996
        %1389 = vmatpush.bf16.msra.mxu0 %v992
        %1390 = vmatmul.bf16.gmra.mxu0 %v566
        %v1391 = vpop.f32.mrf.mxu0
        %v1392 = vadd.f32 %v1379, %v1391
        %v1393 = vpop.f32.mrf.mxu0
        %1394 = vdwg.mxu0
        %1395 = vmatpush.bf16.msra.mxu0 %v1052
        %1396 = vmatpush.bf16.msra.mxu0 %v1048
        %1397 = vmatpush.bf16.msra.mxu0 %v1044
        %1398 = vmatpush.bf16.msra.mxu0 %v1040
        %1399 = vmatpush.bf16.msra.mxu0 %v1036
        %1400 = vmatpush.bf16.msra.mxu0 %v1032
        %1401 = vmatpush.bf16.msra.mxu0 %v1028
        %1402 = vmatpush.bf16.msra.mxu0 %v1024
        %1403 = vmatmul.bf16.gmra.mxu0 %v567
        %v1404 = vpop.f32.mrf.mxu0
        %v1405 = vadd.f32 %v1392, %v1404
        %v1406 = vpop.f32.mrf.mxu0
        %1407 = vdwg.mxu0
        %1408 = vmatpush.bf16.msra.mxu0 %v1084
        %1409 = vmatpush.bf16.msra.mxu0 %v1080
        %1410 = vmatpush.bf16.msra.mxu0 %v1076
        %1411 = vmatpush.bf16.msra.mxu0 %v1072
        %1412 = vmatpush.bf16.msra.mxu0 %v1068
        %1413 = vmatpush.bf16.msra.mxu0 %v1064
        %1414 = vmatpush.bf16.msra.mxu0 %v1060
        %1415 = vmatpush.bf16.msra.mxu0 %v1056
        %1416 = vmatmul.bf16.gmra.mxu0 %v568
        %v1417 = vpop.f32.mrf.mxu0
        %v1418 = vadd.f32 %v1405, %v1417
        %v1419 = vpop.f32.mrf.mxu0
        %1420 = vdwg.mxu0
        %v1421 = vpack.c.bf16 %v1314, %v1262
        %v1422 = vpack.c.bf16 %v1418, %v1366
        %1423 = vst [vmem:[%s411] sm:$0xff] %v1421
        %1424 = vst [vmem:[%s411 + $0x8] sm:$0xff] %v1422
        %v1425 = vld [vmem:[%s362] sm:$0xff]
        %v1426 = vld [vmem:[%s362 + $0x8] sm:$0xff]
        %v1427 = vld [vmem:[#allocation10] sm:$0xff]
        %v1428 = vld [vmem:[#allocation10 + $0x8] sm:$0xff]
        %v1429 = vld [vmem:[#allocation10 + $0x10] sm:$0xff]
        %v1430 = vld [vmem:[#allocation10 + $0x18] sm:$0xff]
        %v1431 = vld [vmem:[#allocation10 + $0x20] sm:$0xff]
        %v1432 = vld [vmem:[#allocation10 + $0x28] sm:$0xff]
        %v1433 = vld [vmem:[#allocation10 + $0x30] sm:$0xff]
        %v1434 = vld [vmem:[#allocation10 + $0x38] sm:$0xff]
        %v1435 = vld [vmem:[#allocation10 + $0x40] sm:$0xff]
        %v1436 = vld [vmem:[#allocation10 + $0x48] sm:$0xff]
        %v1437 = vld [vmem:[#allocation10 + $0x50] sm:$0xff]
        %v1438 = vld [vmem:[#allocation10 + $0x58] sm:$0xff]
        %v1439 = vld [vmem:[#allocation10 + $0x60] sm:$0xff]
        %v1440 = vld [vmem:[#allocation10 + $0x68] sm:$0xff]
        %v1441 = vld [vmem:[#allocation10 + $0x70] sm:$0xff]
        %v1442 = vld [vmem:[#allocation10 + $0x78] sm:$0xff]
        %v1443 = vld [vmem:[#allocation10 + $0x80] sm:$0xff]
        %v1444 = vld [vmem:[#allocation10 + $0x88] sm:$0xff]
        %v1445 = vld [vmem:[#allocation10 + $0x90] sm:$0xff]
        %v1446 = vld [vmem:[#allocation10 + $0x98] sm:$0xff]
        %v1447 = vld [vmem:[#allocation10 + $0xa0] sm:$0xff]
        %v1448 = vld [vmem:[#allocation10 + $0xa8] sm:$0xff]
        %v1449 = vld [vmem:[#allocation10 + $0xb0] sm:$0xff]
        %v1450 = vld [vmem:[#allocation10 + $0xb8] sm:$0xff]
        %v1451 = vld [vmem:[#allocation10 + $0xc0] sm:$0xff]
        %v1452 = vld [vmem:[#allocation10 + $0xc8] sm:$0xff]
        %v1453 = vld [vmem:[#allocation10 + $0xd0] sm:$0xff]
        %v1454 = vld [vmem:[#allocation10 + $0xd8] sm:$0xff]
        %v1455 = vld [vmem:[#allocation10 + $0xe0] sm:$0xff]
        %v1456 = vld [vmem:[#allocation10 + $0xe8] sm:$0xff]
        %v1457 = vld [vmem:[#allocation10 + $0xf0] sm:$0xff]
        %v1458 = vld [vmem:[#allocation10 + $0xf8] sm:$0xff]
        %v1459 = vld [vmem:[#allocation10 + $0x100] sm:$0xff]
        %v1460 = vld [vmem:[#allocation10 + $0x108] sm:$0xff]
        %v1461 = vld [vmem:[#allocation10 + $0x110] sm:$0xff]
        %v1462 = vld [vmem:[#allocation10 + $0x118] sm:$0xff]
        %v1463 = vld [vmem:[#allocation10 + $0x120] sm:$0xff]
        %v1464 = vld [vmem:[#allocation10 + $0x128] sm:$0xff]
        %v1465 = vld [vmem:[#allocation10 + $0x130] sm:$0xff]
        %v1466 = vld [vmem:[#allocation10 + $0x138] sm:$0xff]
        %v1467 = vld [vmem:[#allocation10 + $0x140] sm:$0xff]
        %v1468 = vld [vmem:[#allocation10 + $0x148] sm:$0xff]
        %v1469 = vld [vmem:[#allocation10 + $0x150] sm:$0xff]
        %v1470 = vld [vmem:[#allocation10 + $0x158] sm:$0xff]
        %v1471 = vld [vmem:[#allocation10 + $0x160] sm:$0xff]
        %v1472 = vld [vmem:[#allocation10 + $0x168] sm:$0xff]
        %v1473 = vld [vmem:[#allocation10 + $0x170] sm:$0xff]
        %v1474 = vld [vmem:[#allocation10 + $0x178] sm:$0xff]
        %v1475 = vld [vmem:[#allocation10 + $0x180] sm:$0xff]
        %v1476 = vld [vmem:[#allocation10 + $0x188] sm:$0xff]
        %v1477 = vld [vmem:[#allocation10 + $0x190] sm:$0xff]
        %v1478 = vld [vmem:[#allocation10 + $0x198] sm:$0xff]
        %v1479 = vld [vmem:[#allocation10 + $0x1a0] sm:$0xff]
        %v1480 = vld [vmem:[#allocation10 + $0x1a8] sm:$0xff]
        %v1481 = vld [vmem:[#allocation10 + $0x1b0] sm:$0xff]
        %v1482 = vld [vmem:[#allocation10 + $0x1b8] sm:$0xff]
        %v1483 = vld [vmem:[#allocation10 + $0x1c0] sm:$0xff]
        %v1484 = vld [vmem:[#allocation10 + $0x1c8] sm:$0xff]
        %v1485 = vld [vmem:[#allocation10 + $0x1d0] sm:$0xff]
        %v1486 = vld [vmem:[#allocation10 + $0x1d8] sm:$0xff]
        %v1487 = vld [vmem:[#allocation10 + $0x1e0] sm:$0xff]
        %v1488 = vld [vmem:[#allocation10 + $0x1e8] sm:$0xff]
        %v1489 = vld [vmem:[#allocation10 + $0x1f0] sm:$0xff]
        %v1490 = vld [vmem:[#allocation10 + $0x1f8] sm:$0xff]
        %v1491 = vld [vmem:[#allocation10 + $0x200] sm:$0xff]
        %v1492 = vld [vmem:[#allocation10 + $0x208] sm:$0xff]
        %v1493 = vld [vmem:[#allocation10 + $0x210] sm:$0xff]
        %v1494 = vld [vmem:[#allocation10 + $0x218] sm:$0xff]
        %v1495 = vld [vmem:[#allocation10 + $0x220] sm:$0xff]
        %v1496 = vld [vmem:[#allocation10 + $0x228] sm:$0xff]
        %v1497 = vld [vmem:[#allocation10 + $0x230] sm:$0xff]
        %v1498 = vld [vmem:[#allocation10 + $0x238] sm:$0xff]
        %v1499 = vld [vmem:[#allocation10 + $0x240] sm:$0xff]
        %v1500 = vld [vmem:[#allocation10 + $0x248] sm:$0xff]
        %v1501 = vld [vmem:[#allocation10 + $0x250] sm:$0xff]
        %v1502 = vld [vmem:[#allocation10 + $0x258] sm:$0xff]
        %v1503 = vld [vmem:[#allocation10 + $0x260] sm:$0xff]
        %v1504 = vld [vmem:[#allocation10 + $0x268] sm:$0xff]
        %v1505 = vld [vmem:[#allocation10 + $0x270] sm:$0xff]
        %v1506 = vld [vmem:[#allocation10 + $0x278] sm:$0xff]
        %v1507 = vld [vmem:[#allocation10 + $0x280] sm:$0xff]
        %v1508 = vld [vmem:[#allocation10 + $0x288] sm:$0xff]
        %v1509 = vld [vmem:[#allocation10 + $0x290] sm:$0xff]
        %v1510 = vld [vmem:[#allocation10 + $0x298] sm:$0xff]
        %v1511 = vld [vmem:[#allocation10 + $0x2a0] sm:$0xff]
        %v1512 = vld [vmem:[#allocation10 + $0x2a8] sm:$0xff]
        %v1513 = vld [vmem:[#allocation10 + $0x2b0] sm:$0xff]
        %v1514 = vld [vmem:[#allocation10 + $0x2b8] sm:$0xff]
        %v1515 = vld [vmem:[#allocation10 + $0x2c0] sm:$0xff]
        %v1516 = vld [vmem:[#allocation10 + $0x2c8] sm:$0xff]
        %v1517 = vld [vmem:[#allocation10 + $0x2d0] sm:$0xff]
        %v1518 = vld [vmem:[#allocation10 + $0x2d8] sm:$0xff]
        %v1519 = vld [vmem:[#allocation10 + $0x2e0] sm:$0xff]
        %v1520 = vld [vmem:[#allocation10 + $0x2e8] sm:$0xff]
        %v1521 = vld [vmem:[#allocation10 + $0x2f0] sm:$0xff]
        %v1522 = vld [vmem:[#allocation10 + $0x2f8] sm:$0xff]
        %v1523 = vld [vmem:[#allocation10 + $0x300] sm:$0xff]
        %v1524 = vld [vmem:[#allocation10 + $0x308] sm:$0xff]
        %v1525 = vld [vmem:[#allocation10 + $0x310] sm:$0xff]
        %v1526 = vld [vmem:[#allocation10 + $0x318] sm:$0xff]
        %v1527 = vld [vmem:[#allocation10 + $0x320] sm:$0xff]
        %v1528 = vld [vmem:[#allocation10 + $0x328] sm:$0xff]
        %v1529 = vld [vmem:[#allocation10 + $0x330] sm:$0xff]
        %v1530 = vld [vmem:[#allocation10 + $0x338] sm:$0xff]
        %v1531 = vld [vmem:[#allocation10 + $0x340] sm:$0xff]
        %v1532 = vld [vmem:[#allocation10 + $0x348] sm:$0xff]
        %v1533 = vld [vmem:[#allocation10 + $0x350] sm:$0xff]
        %v1534 = vld [vmem:[#allocation10 + $0x358] sm:$0xff]
        %v1535 = vld [vmem:[#allocation10 + $0x360] sm:$0xff]
        %v1536 = vld [vmem:[#allocation10 + $0x368] sm:$0xff]
        %v1537 = vld [vmem:[#allocation10 + $0x370] sm:$0xff]
        %v1538 = vld [vmem:[#allocation10 + $0x378] sm:$0xff]
        %v1539 = vld [vmem:[#allocation10 + $0x380] sm:$0xff]
        %v1540 = vld [vmem:[#allocation10 + $0x388] sm:$0xff]
        %v1541 = vld [vmem:[#allocation10 + $0x390] sm:$0xff]
        %v1542 = vld [vmem:[#allocation10 + $0x398] sm:$0xff]
        %v1543 = vld [vmem:[#allocation10 + $0x3a0] sm:$0xff]
        %v1544 = vld [vmem:[#allocation10 + $0x3a8] sm:$0xff]
        %v1545 = vld [vmem:[#allocation10 + $0x3b0] sm:$0xff]
        %v1546 = vld [vmem:[#allocation10 + $0x3b8] sm:$0xff]
        %v1547 = vld [vmem:[#allocation10 + $0x3c0] sm:$0xff]
        %v1548 = vld [vmem:[#allocation10 + $0x3c8] sm:$0xff]
        %v1549 = vld [vmem:[#allocation10 + $0x3d0] sm:$0xff]
        %v1550 = vld [vmem:[#allocation10 + $0x3d8] sm:$0xff]
        %v1551 = vld [vmem:[#allocation10 + $0x3e0] sm:$0xff]
        %v1552 = vld [vmem:[#allocation10 + $0x3e8] sm:$0xff]
        %v1553 = vld [vmem:[#allocation10 + $0x3f0] sm:$0xff]
        %v1554 = vld [vmem:[#allocation10 + $0x3f8] sm:$0xff]
        %v1555 = vld [vmem:[%s5] sm:$0xf]
        %v1557 = vperm.slane %v1555, 0
        %v1558 = vperm.slane %v1555, 1
        %v1559 = vperm.slane %v1555, 2
        %v1560 = vperm.slane %v1555, 3
        %v1567 = vunpack.c.l.b16 %v1425
        %v1568 = vunpack.c.h.b16 %v1425
        %v1569 = vunpack.c.l.b16 %v1426
        %v1570 = vunpack.c.h.b16 %v1426
        %v1571 = vpack.c.b16 %v1567, %v1567
        %v1572 = vpack.c.b16 %v1568, %v1568
        %v1573 = vpack.c.b16 %v1569, %v1569
        %v1574 = vpack.c.b16 %v1570, %v1570
        %v1707 = vunpack.c.l.b16 %v1427
        %v1708 = vunpack.c.h.b16 %v1427
        %v1709 = vunpack.c.l.b16 %v1428
        %v1710 = vunpack.c.h.b16 %v1428
        %v1711 = vunpack.c.l.b16 %v1429
        %v1712 = vunpack.c.h.b16 %v1429
        %v1713 = vunpack.c.l.b16 %v1430
        %v1714 = vunpack.c.h.b16 %v1430
        %v1715 = vunpack.c.l.b16 %v1431
        %v1716 = vunpack.c.h.b16 %v1431
        %v1717 = vunpack.c.l.b16 %v1432
        %v1718 = vunpack.c.h.b16 %v1432
        %v1719 = vunpack.c.l.b16 %v1433
        %v1720 = vunpack.c.h.b16 %v1433
        %v1721 = vunpack.c.l.b16 %v1434
        %v1722 = vunpack.c.h.b16 %v1434
        %v1723 = vunpack.c.l.b16 %v1435
        %v1724 = vunpack.c.h.b16 %v1435
        %v1725 = vunpack.c.l.b16 %v1436
        %v1726 = vunpack.c.h.b16 %v1436
        %v1727 = vunpack.c.l.b16 %v1437
        %v1728 = vunpack.c.h.b16 %v1437
        %v1729 = vunpack.c.l.b16 %v1438
        %v1730 = vunpack.c.h.b16 %v1438
        %v1731 = vunpack.c.l.b16 %v1439
        %v1732 = vunpack.c.h.b16 %v1439
        %v1733 = vunpack.c.l.b16 %v1440
        %v1734 = vunpack.c.h.b16 %v1440
        %v1735 = vunpack.c.l.b16 %v1441
        %v1736 = vunpack.c.h.b16 %v1441
        %v1737 = vunpack.c.l.b16 %v1442
        %v1738 = vunpack.c.h.b16 %v1442
        %v1739 = vunpack.c.l.b16 %v1443
        %v1740 = vunpack.c.h.b16 %v1443
        %v1741 = vunpack.c.l.b16 %v1444
        %v1742 = vunpack.c.h.b16 %v1444
        %v1743 = vunpack.c.l.b16 %v1445
        %v1744 = vunpack.c.h.b16 %v1445
        %v1745 = vunpack.c.l.b16 %v1446
        %v1746 = vunpack.c.h.b16 %v1446
        %v1747 = vunpack.c.l.b16 %v1447
        %v1748 = vunpack.c.h.b16 %v1447
        %v1749 = vunpack.c.l.b16 %v1448
        %v1750 = vunpack.c.h.b16 %v1448
        %v1751 = vunpack.c.l.b16 %v1449
        %v1752 = vunpack.c.h.b16 %v1449
        %v1753 = vunpack.c.l.b16 %v1450
        %v1754 = vunpack.c.h.b16 %v1450
        %v1755 = vunpack.c.l.b16 %v1451
        %v1756 = vunpack.c.h.b16 %v1451
        %v1757 = vunpack.c.l.b16 %v1452
        %v1758 = vunpack.c.h.b16 %v1452
        %v1759 = vunpack.c.l.b16 %v1453
        %v1760 = vunpack.c.h.b16 %v1453
        %v1761 = vunpack.c.l.b16 %v1454
        %v1762 = vunpack.c.h.b16 %v1454
        %v1763 = vunpack.c.l.b16 %v1455
        %v1764 = vunpack.c.h.b16 %v1455
        %v1765 = vunpack.c.l.b16 %v1456
        %v1766 = vunpack.c.h.b16 %v1456
        %v1767 = vunpack.c.l.b16 %v1457
        %v1768 = vunpack.c.h.b16 %v1457
        %v1769 = vunpack.c.l.b16 %v1458
        %v1770 = vunpack.c.h.b16 %v1458
        %v1771 = vunpack.c.l.b16 %v1459
        %v1772 = vunpack.c.h.b16 %v1459
        %v1773 = vunpack.c.l.b16 %v1460
        %v1774 = vunpack.c.h.b16 %v1460
        %v1775 = vunpack.c.l.b16 %v1461
        %v1776 = vunpack.c.h.b16 %v1461
        %v1777 = vunpack.c.l.b16 %v1462
        %v1778 = vunpack.c.h.b16 %v1462
        %v1779 = vunpack.c.l.b16 %v1463
        %v1780 = vunpack.c.h.b16 %v1463
        %v1781 = vunpack.c.l.b16 %v1464
        %v1782 = vunpack.c.h.b16 %v1464
        %v1783 = vunpack.c.l.b16 %v1465
        %v1784 = vunpack.c.h.b16 %v1465
        %v1785 = vunpack.c.l.b16 %v1466
        %v1786 = vunpack.c.h.b16 %v1466
        %v1787 = vunpack.c.l.b16 %v1467
        %v1788 = vunpack.c.h.b16 %v1467
        %v1789 = vunpack.c.l.b16 %v1468
        %v1790 = vunpack.c.h.b16 %v1468
        %v1791 = vunpack.c.l.b16 %v1469
        %v1792 = vunpack.c.h.b16 %v1469
        %v1793 = vunpack.c.l.b16 %v1470
        %v1794 = vunpack.c.h.b16 %v1470
        %v1795 = vunpack.c.l.b16 %v1471
        %v1796 = vunpack.c.h.b16 %v1471
        %v1797 = vunpack.c.l.b16 %v1472
        %v1798 = vunpack.c.h.b16 %v1472
        %v1799 = vunpack.c.l.b16 %v1473
        %v1800 = vunpack.c.h.b16 %v1473
        %v1801 = vunpack.c.l.b16 %v1474
        %v1802 = vunpack.c.h.b16 %v1474
        %v1803 = vunpack.c.l.b16 %v1475
        %v1804 = vunpack.c.h.b16 %v1475
        %v1805 = vunpack.c.l.b16 %v1476
        %v1806 = vunpack.c.h.b16 %v1476
        %v1807 = vunpack.c.l.b16 %v1477
        %v1808 = vunpack.c.h.b16 %v1477
        %v1809 = vunpack.c.l.b16 %v1478
        %v1810 = vunpack.c.h.b16 %v1478
        %v1811 = vunpack.c.l.b16 %v1479
        %v1812 = vunpack.c.h.b16 %v1479
        %v1813 = vunpack.c.l.b16 %v1480
        %v1814 = vunpack.c.h.b16 %v1480
        %v1815 = vunpack.c.l.b16 %v1481
        %v1816 = vunpack.c.h.b16 %v1481
        %v1817 = vunpack.c.l.b16 %v1482
        %v1818 = vunpack.c.h.b16 %v1482
        %v1819 = vunpack.c.l.b16 %v1483
        %v1820 = vunpack.c.h.b16 %v1483
        %v1821 = vunpack.c.l.b16 %v1484
        %v1822 = vunpack.c.h.b16 %v1484
        %v1823 = vunpack.c.l.b16 %v1485
        %v1824 = vunpack.c.h.b16 %v1485
        %v1825 = vunpack.c.l.b16 %v1486
        %v1826 = vunpack.c.h.b16 %v1486
        %v1827 = vunpack.c.l.b16 %v1487
        %v1828 = vunpack.c.h.b16 %v1487
        %v1829 = vunpack.c.l.b16 %v1488
        %v1830 = vunpack.c.h.b16 %v1488
        %v1831 = vunpack.c.l.b16 %v1489
        %v1832 = vunpack.c.h.b16 %v1489
        %v1833 = vunpack.c.l.b16 %v1490
        %v1834 = vunpack.c.h.b16 %v1490
        %v1835 = vunpack.c.l.b16 %v1491
        %v1836 = vunpack.c.h.b16 %v1491
        %v1837 = vunpack.c.l.b16 %v1492
        %v1838 = vunpack.c.h.b16 %v1492
        %v1839 = vunpack.c.l.b16 %v1493
        %v1840 = vunpack.c.h.b16 %v1493
        %v1841 = vunpack.c.l.b16 %v1494
        %v1842 = vunpack.c.h.b16 %v1494
        %v1843 = vunpack.c.l.b16 %v1495
        %v1844 = vunpack.c.h.b16 %v1495
        %v1845 = vunpack.c.l.b16 %v1496
        %v1846 = vunpack.c.h.b16 %v1496
        %v1847 = vunpack.c.l.b16 %v1497
        %v1848 = vunpack.c.h.b16 %v1497
        %v1849 = vunpack.c.l.b16 %v1498
        %v1850 = vunpack.c.h.b16 %v1498
        %v1851 = vunpack.c.l.b16 %v1499
        %v1852 = vunpack.c.h.b16 %v1499
        %v1853 = vunpack.c.l.b16 %v1500
        %v1854 = vunpack.c.h.b16 %v1500
        %v1855 = vunpack.c.l.b16 %v1501
        %v1856 = vunpack.c.h.b16 %v1501
        %v1857 = vunpack.c.l.b16 %v1502
        %v1858 = vunpack.c.h.b16 %v1502
        %v1859 = vunpack.c.l.b16 %v1503
        %v1860 = vunpack.c.h.b16 %v1503
        %v1861 = vunpack.c.l.b16 %v1504
        %v1862 = vunpack.c.h.b16 %v1504
        %v1863 = vunpack.c.l.b16 %v1505
        %v1864 = vunpack.c.h.b16 %v1505
        %v1865 = vunpack.c.l.b16 %v1506
        %v1866 = vunpack.c.h.b16 %v1506
        %v1867 = vunpack.c.l.b16 %v1507
        %v1868 = vunpack.c.h.b16 %v1507
        %v1869 = vunpack.c.l.b16 %v1508
        %v1870 = vunpack.c.h.b16 %v1508
        %v1871 = vunpack.c.l.b16 %v1509
        %v1872 = vunpack.c.h.b16 %v1509
        %v1873 = vunpack.c.l.b16 %v1510
        %v1874 = vunpack.c.h.b16 %v1510
        %v1875 = vunpack.c.l.b16 %v1511
        %v1876 = vunpack.c.h.b16 %v1511
        %v1877 = vunpack.c.l.b16 %v1512
        %v1878 = vunpack.c.h.b16 %v1512
        %v1879 = vunpack.c.l.b16 %v1513
        %v1880 = vunpack.c.h.b16 %v1513
        %v1881 = vunpack.c.l.b16 %v1514
        %v1882 = vunpack.c.h.b16 %v1514
        %v1883 = vunpack.c.l.b16 %v1515
        %v1884 = vunpack.c.h.b16 %v1515
        %v1885 = vunpack.c.l.b16 %v1516
        %v1886 = vunpack.c.h.b16 %v1516
        %v1887 = vunpack.c.l.b16 %v1517
        %v1888 = vunpack.c.h.b16 %v1517
        %v1889 = vunpack.c.l.b16 %v1518
        %v1890 = vunpack.c.h.b16 %v1518
        %v1891 = vunpack.c.l.b16 %v1519
        %v1892 = vunpack.c.h.b16 %v1519
        %v1893 = vunpack.c.l.b16 %v1520
        %v1894 = vunpack.c.h.b16 %v1520
        %v1895 = vunpack.c.l.b16 %v1521
        %v1896 = vunpack.c.h.b16 %v1521
        %v1897 = vunpack.c.l.b16 %v1522
        %v1898 = vunpack.c.h.b16 %v1522
        %v1899 = vunpack.c.l.b16 %v1523
        %v1900 = vunpack.c.h.b16 %v1523
        %v1901 = vunpack.c.l.b16 %v1524
        %v1902 = vunpack.c.h.b16 %v1524
        %v1903 = vunpack.c.l.b16 %v1525
        %v1904 = vunpack.c.h.b16 %v1525
        %v1905 = vunpack.c.l.b16 %v1526
        %v1906 = vunpack.c.h.b16 %v1526
        %v1907 = vunpack.c.l.b16 %v1527
        %v1908 = vunpack.c.h.b16 %v1527
        %v1909 = vunpack.c.l.b16 %v1528
        %v1910 = vunpack.c.h.b16 %v1528
        %v1911 = vunpack.c.l.b16 %v1529
        %v1912 = vunpack.c.h.b16 %v1529
        %v1913 = vunpack.c.l.b16 %v1530
        %v1914 = vunpack.c.h.b16 %v1530
        %v1915 = vunpack.c.l.b16 %v1531
        %v1916 = vunpack.c.h.b16 %v1531
        %v1917 = vunpack.c.l.b16 %v1532
        %v1918 = vunpack.c.h.b16 %v1532
        %v1919 = vunpack.c.l.b16 %v1533
        %v1920 = vunpack.c.h.b16 %v1533
        %v1921 = vunpack.c.l.b16 %v1534
        %v1922 = vunpack.c.h.b16 %v1534
        %v1923 = vunpack.c.l.b16 %v1535
        %v1924 = vunpack.c.h.b16 %v1535
        %v1925 = vunpack.c.l.b16 %v1536
        %v1926 = vunpack.c.h.b16 %v1536
        %v1927 = vunpack.c.l.b16 %v1537
        %v1928 = vunpack.c.h.b16 %v1537
        %v1929 = vunpack.c.l.b16 %v1538
        %v1930 = vunpack.c.h.b16 %v1538
        %v1931 = vunpack.c.l.b16 %v1539
        %v1932 = vunpack.c.h.b16 %v1539
        %v1933 = vunpack.c.l.b16 %v1540
        %v1934 = vunpack.c.h.b16 %v1540
        %v1935 = vunpack.c.l.b16 %v1541
        %v1936 = vunpack.c.h.b16 %v1541
        %v1937 = vunpack.c.l.b16 %v1542
        %v1938 = vunpack.c.h.b16 %v1542
        %v1939 = vunpack.c.l.b16 %v1543
        %v1940 = vunpack.c.h.b16 %v1543
        %v1941 = vunpack.c.l.b16 %v1544
        %v1942 = vunpack.c.h.b16 %v1544
        %v1943 = vunpack.c.l.b16 %v1545
        %v1944 = vunpack.c.h.b16 %v1545
        %v1945 = vunpack.c.l.b16 %v1546
        %v1946 = vunpack.c.h.b16 %v1546
        %v1947 = vunpack.c.l.b16 %v1547
        %v1948 = vunpack.c.h.b16 %v1547
        %v1949 = vunpack.c.l.b16 %v1548
        %v1950 = vunpack.c.h.b16 %v1548
        %v1951 = vunpack.c.l.b16 %v1549
        %v1952 = vunpack.c.h.b16 %v1549
        %v1953 = vunpack.c.l.b16 %v1550
        %v1954 = vunpack.c.h.b16 %v1550
        %v1955 = vunpack.c.l.b16 %v1551
        %v1956 = vunpack.c.h.b16 %v1551
        %v1957 = vunpack.c.l.b16 %v1552
        %v1958 = vunpack.c.h.b16 %v1552
        %v1959 = vunpack.c.l.b16 %v1553
        %v1960 = vunpack.c.h.b16 %v1553
        %v1961 = vunpack.c.l.b16 %v1554
        %v1962 = vunpack.c.h.b16 %v1554
        %v1963 = vpack.c.b16 %v1711, %v1707
        %v1964 = vpack.c.b16 %v1712, %v1708
        %v1965 = vpack.c.b16 %v1713, %v1709
        %v1966 = vpack.c.b16 %v1714, %v1710
        %v1967 = vpack.c.b16 %v1719, %v1715
        %v1968 = vpack.c.b16 %v1720, %v1716
        %v1969 = vpack.c.b16 %v1721, %v1717
        %v1970 = vpack.c.b16 %v1722, %v1718
        %v1971 = vpack.c.b16 %v1727, %v1723
        %v1972 = vpack.c.b16 %v1728, %v1724
        %v1973 = vpack.c.b16 %v1729, %v1725
        %v1974 = vpack.c.b16 %v1730, %v1726
        %v1975 = vpack.c.b16 %v1735, %v1731
        %v1976 = vpack.c.b16 %v1736, %v1732
        %v1977 = vpack.c.b16 %v1737, %v1733
        %v1978 = vpack.c.b16 %v1738, %v1734
        %v1979 = vpack.c.b16 %v1743, %v1739
        %v1980 = vpack.c.b16 %v1744, %v1740
        %v1981 = vpack.c.b16 %v1745, %v1741
        %v1982 = vpack.c.b16 %v1746, %v1742
        %v1983 = vpack.c.b16 %v1751, %v1747
        %v1984 = vpack.c.b16 %v1752, %v1748
        %v1985 = vpack.c.b16 %v1753, %v1749
        %v1986 = vpack.c.b16 %v1754, %v1750
        %v1987 = vpack.c.b16 %v1759, %v1755
        %v1988 = vpack.c.b16 %v1760, %v1756
        %v1989 = vpack.c.b16 %v1761, %v1757
        %v1990 = vpack.c.b16 %v1762, %v1758
        %v1991 = vpack.c.b16 %v1767, %v1763
        %v1992 = vpack.c.b16 %v1768, %v1764
        %v1993 = vpack.c.b16 %v1769, %v1765
        %v1994 = vpack.c.b16 %v1770, %v1766
        %v1995 = vpack.c.b16 %v1775, %v1771
        %v1996 = vpack.c.b16 %v1776, %v1772
        %v1997 = vpack.c.b16 %v1777, %v1773
        %v1998 = vpack.c.b16 %v1778, %v1774
        %v1999 = vpack.c.b16 %v1783, %v1779
        %v2000 = vpack.c.b16 %v1784, %v1780
        %v2001 = vpack.c.b16 %v1785, %v1781
        %v2002 = vpack.c.b16 %v1786, %v1782
        %v2003 = vpack.c.b16 %v1791, %v1787
        %v2004 = vpack.c.b16 %v1792, %v1788
        %v2005 = vpack.c.b16 %v1793, %v1789
        %v2006 = vpack.c.b16 %v1794, %v1790
        %v2007 = vpack.c.b16 %v1799, %v1795
        %v2008 = vpack.c.b16 %v1800, %v1796
        %v2009 = vpack.c.b16 %v1801, %v1797
        %v2010 = vpack.c.b16 %v1802, %v1798
        %v2011 = vpack.c.b16 %v1807, %v1803
        %v2012 = vpack.c.b16 %v1808, %v1804
        %v2013 = vpack.c.b16 %v1809, %v1805
        %v2014 = vpack.c.b16 %v1810, %v1806
        %v2015 = vpack.c.b16 %v1815, %v1811
        %v2016 = vpack.c.b16 %v1816, %v1812
        %v2017 = vpack.c.b16 %v1817, %v1813
        %v2018 = vpack.c.b16 %v1818, %v1814
        %v2019 = vpack.c.b16 %v1823, %v1819
        %v2020 = vpack.c.b16 %v1824, %v1820
        %v2021 = vpack.c.b16 %v1825, %v1821
        %v2022 = vpack.c.b16 %v1826, %v1822
        %v2023 = vpack.c.b16 %v1831, %v1827
        %v2024 = vpack.c.b16 %v1832, %v1828
        %v2025 = vpack.c.b16 %v1833, %v1829
        %v2026 = vpack.c.b16 %v1834, %v1830
        %v2027 = vpack.c.b16 %v1839, %v1835
        %v2028 = vpack.c.b16 %v1840, %v1836
        %v2029 = vpack.c.b16 %v1841, %v1837
        %v2030 = vpack.c.b16 %v1842, %v1838
        %v2031 = vpack.c.b16 %v1847, %v1843
        %v2032 = vpack.c.b16 %v1848, %v1844
        %v2033 = vpack.c.b16 %v1849, %v1845
        %v2034 = vpack.c.b16 %v1850, %v1846
        %v2035 = vpack.c.b16 %v1855, %v1851
        %v2036 = vpack.c.b16 %v1856, %v1852
        %v2037 = vpack.c.b16 %v1857, %v1853
        %v2038 = vpack.c.b16 %v1858, %v1854
        %v2039 = vpack.c.b16 %v1863, %v1859
        %v2040 = vpack.c.b16 %v1864, %v1860
        %v2041 = vpack.c.b16 %v1865, %v1861
        %v2042 = vpack.c.b16 %v1866, %v1862
        %v2043 = vpack.c.b16 %v1871, %v1867
        %v2044 = vpack.c.b16 %v1872, %v1868
        %v2045 = vpack.c.b16 %v1873, %v1869
        %v2046 = vpack.c.b16 %v1874, %v1870
        %v2047 = vpack.c.b16 %v1879, %v1875
        %v2048 = vpack.c.b16 %v1880, %v1876
        %v2049 = vpack.c.b16 %v1881, %v1877
        %v2050 = vpack.c.b16 %v1882, %v1878
        %v2051 = vpack.c.b16 %v1887, %v1883
        %v2052 = vpack.c.b16 %v1888, %v1884
        %v2053 = vpack.c.b16 %v1889, %v1885
        %v2054 = vpack.c.b16 %v1890, %v1886
        %v2055 = vpack.c.b16 %v1895, %v1891
        %v2056 = vpack.c.b16 %v1896, %v1892
        %v2057 = vpack.c.b16 %v1897, %v1893
        %v2058 = vpack.c.b16 %v1898, %v1894
        %v2059 = vpack.c.b16 %v1903, %v1899
        %v2060 = vpack.c.b16 %v1904, %v1900
        %v2061 = vpack.c.b16 %v1905, %v1901
        %v2062 = vpack.c.b16 %v1906, %v1902
        %v2063 = vpack.c.b16 %v1911, %v1907
        %v2064 = vpack.c.b16 %v1912, %v1908
        %v2065 = vpack.c.b16 %v1913, %v1909
        %v2066 = vpack.c.b16 %v1914, %v1910
        %v2067 = vpack.c.b16 %v1919, %v1915
        %v2068 = vpack.c.b16 %v1920, %v1916
        %v2069 = vpack.c.b16 %v1921, %v1917
        %v2070 = vpack.c.b16 %v1922, %v1918
        %v2071 = vpack.c.b16 %v1927, %v1923
        %v2072 = vpack.c.b16 %v1928, %v1924
        %v2073 = vpack.c.b16 %v1929, %v1925
        %v2074 = vpack.c.b16 %v1930, %v1926
        %v2075 = vpack.c.b16 %v1935, %v1931
        %v2076 = vpack.c.b16 %v1936, %v1932
        %v2077 = vpack.c.b16 %v1937, %v1933
        %v2078 = vpack.c.b16 %v1938, %v1934
        %v2079 = vpack.c.b16 %v1943, %v1939
        %v2080 = vpack.c.b16 %v1944, %v1940
        %v2081 = vpack.c.b16 %v1945, %v1941
        %v2082 = vpack.c.b16 %v1946, %v1942
        %v2083 = vpack.c.b16 %v1951, %v1947
        %v2084 = vpack.c.b16 %v1952, %v1948
        %v2085 = vpack.c.b16 %v1953, %v1949
        %v2086 = vpack.c.b16 %v1954, %v1950
        %v2087 = vpack.c.b16 %v1959, %v1955
        %v2088 = vpack.c.b16 %v1960, %v1956
        %v2089 = vpack.c.b16 %v1961, %v1957
        %v2090 = vpack.c.b16 %v1962, %v1958
        %2219 = vmatpush.bf16.msra.mxu0 %v1991
        %2220 = vmatpush.bf16.msra.mxu0 %v1987
        %2221 = vmatpush.bf16.msra.mxu0 %v1983
        %2222 = vmatpush.bf16.msra.mxu0 %v1979
        %2223 = vmatpush.bf16.msra.mxu0 %v1975
        %2224 = vmatpush.bf16.msra.mxu0 %v1971
        %2225 = vmatpush.bf16.msra.mxu0 %v1967
        %2226 = vmatpush.bf16.msra.mxu0 %v1963
        %2227 = vmatmul.bf16.gmra.mxu0 %v1571
        %v2228 = vpop.f32.mrf.mxu0
        %v2229 = vadd.f32 %v1557, %v2228
        %v2230 = vpop.f32.mrf.mxu0
        %2231 = vdwg.mxu0
        %2232 = vmatpush.bf16.msra.mxu0 %v2023
        %2233 = vmatpush.bf16.msra.mxu0 %v2019
        %2234 = vmatpush.bf16.msra.mxu0 %v2015
        %2235 = vmatpush.bf16.msra.mxu0 %v2011
        %2236 = vmatpush.bf16.msra.mxu0 %v2007
        %2237 = vmatpush.bf16.msra.mxu0 %v2003
        %2238 = vmatpush.bf16.msra.mxu0 %v1999
        %2239 = vmatpush.bf16.msra.mxu0 %v1995
        %2240 = vmatmul.bf16.gmra.mxu0 %v1572
        %v2241 = vpop.f32.mrf.mxu0
        %v2242 = vadd.f32 %v2229, %v2241
        %v2243 = vpop.f32.mrf.mxu0
        %2244 = vdwg.mxu0
        %2245 = vmatpush.bf16.msra.mxu0 %v2055
        %2246 = vmatpush.bf16.msra.mxu0 %v2051
        %2247 = vmatpush.bf16.msra.mxu0 %v2047
        %2248 = vmatpush.bf16.msra.mxu0 %v2043
        %2249 = vmatpush.bf16.msra.mxu0 %v2039
        %2250 = vmatpush.bf16.msra.mxu0 %v2035
        %2251 = vmatpush.bf16.msra.mxu0 %v2031
        %2252 = vmatpush.bf16.msra.mxu0 %v2027
        %2253 = vmatmul.bf16.gmra.mxu0 %v1573
        %v2254 = vpop.f32.mrf.mxu0
        %v2255 = vadd.f32 %v2242, %v2254
        %v2256 = vpop.f32.mrf.mxu0
        %2257 = vdwg.mxu0
        %2258 = vmatpush.bf16.msra.mxu0 %v2087
        %2259 = vmatpush.bf16.msra.mxu0 %v2083
        %2260 = vmatpush.bf16.msra.mxu0 %v2079
        %2261 = vmatpush.bf16.msra.mxu0 %v2075
        %2262 = vmatpush.bf16.msra.mxu0 %v2071
        %2263 = vmatpush.bf16.msra.mxu0 %v2067
        %2264 = vmatpush.bf16.msra.mxu0 %v2063
        %2265 = vmatpush.bf16.msra.mxu0 %v2059
        %2266 = vmatmul.bf16.gmra.mxu0 %v1574
        %v2267 = vpop.f32.mrf.mxu0
        %v2268 = vadd.f32 %v2255, %v2267
        %v2269 = vpop.f32.mrf.mxu0
        %2270 = vdwg.mxu0
        %2271 = vmatpush.bf16.msra.mxu0 %v1992
        %2272 = vmatpush.bf16.msra.mxu0 %v1988
        %2273 = vmatpush.bf16.msra.mxu0 %v1984
        %2274 = vmatpush.bf16.msra.mxu0 %v1980
        %2275 = vmatpush.bf16.msra.mxu0 %v1976
        %2276 = vmatpush.bf16.msra.mxu0 %v1972
        %2277 = vmatpush.bf16.msra.mxu0 %v1968
        %2278 = vmatpush.bf16.msra.mxu0 %v1964
        %2279 = vmatmul.bf16.gmra.mxu0 %v1571
        %v2280 = vpop.f32.mrf.mxu0
        %v2281 = vadd.f32 %v1558, %v2280
        %v2282 = vpop.f32.mrf.mxu0
        %2283 = vdwg.mxu0
        %2284 = vmatpush.bf16.msra.mxu0 %v2024
        %2285 = vmatpush.bf16.msra.mxu0 %v2020
        %2286 = vmatpush.bf16.msra.mxu0 %v2016
        %2287 = vmatpush.bf16.msra.mxu0 %v2012
        %2288 = vmatpush.bf16.msra.mxu0 %v2008
        %2289 = vmatpush.bf16.msra.mxu0 %v2004
        %2290 = vmatpush.bf16.msra.mxu0 %v2000
        %2291 = vmatpush.bf16.msra.mxu0 %v1996
        %2292 = vmatmul.bf16.gmra.mxu0 %v1572
        %v2293 = vpop.f32.mrf.mxu0
        %v2294 = vadd.f32 %v2281, %v2293
        %v2295 = vpop.f32.mrf.mxu0
        %2296 = vdwg.mxu0
        %2297 = vmatpush.bf16.msra.mxu0 %v2056
        %2298 = vmatpush.bf16.msra.mxu0 %v2052
        %2299 = vmatpush.bf16.msra.mxu0 %v2048
        %2300 = vmatpush.bf16.msra.mxu0 %v2044
        %2301 = vmatpush.bf16.msra.mxu0 %v2040
        %2302 = vmatpush.bf16.msra.mxu0 %v2036
        %2303 = vmatpush.bf16.msra.mxu0 %v2032
        %2304 = vmatpush.bf16.msra.mxu0 %v2028
        %2305 = vmatmul.bf16.gmra.mxu0 %v1573
        %v2306 = vpop.f32.mrf.mxu0
        %v2307 = vadd.f32 %v2294, %v2306
        %v2308 = vpop.f32.mrf.mxu0
        %2309 = vdwg.mxu0
        %2310 = vmatpush.bf16.msra.mxu0 %v2088
        %2311 = vmatpush.bf16.msra.mxu0 %v2084
        %2312 = vmatpush.bf16.msra.mxu0 %v2080
        %2313 = vmatpush.bf16.msra.mxu0 %v2076
        %2314 = vmatpush.bf16.msra.mxu0 %v2072
        %2315 = vmatpush.bf16.msra.mxu0 %v2068
        %2316 = vmatpush.bf16.msra.mxu0 %v2064
        %2317 = vmatpush.bf16.msra.mxu0 %v2060
        %2318 = vmatmul.bf16.gmra.mxu0 %v1574
        %v2319 = vpop.f32.mrf.mxu0
        %v2320 = vadd.f32 %v2307, %v2319
        %v2321 = vpop.f32.mrf.mxu0
        %2322 = vdwg.mxu0
        %2323 = vmatpush.bf16.msra.mxu0 %v1993
        %2324 = vmatpush.bf16.msra.mxu0 %v1989
        %2325 = vmatpush.bf16.msra.mxu0 %v1985
        %2326 = vmatpush.bf16.msra.mxu0 %v1981
        %2327 = vmatpush.bf16.msra.mxu0 %v1977
        %2328 = vmatpush.bf16.msra.mxu0 %v1973
        %2329 = vmatpush.bf16.msra.mxu0 %v1969
        %2330 = vmatpush.bf16.msra.mxu0 %v1965
        %2331 = vmatmul.bf16.gmra.mxu0 %v1571
        %v2332 = vpop.f32.mrf.mxu0
        %v2333 = vadd.f32 %v1559, %v2332
        %v2334 = vpop.f32.mrf.mxu0
        %2335 = vdwg.mxu0
        %2336 = vmatpush.bf16.msra.mxu0 %v2025
        %2337 = vmatpush.bf16.msra.mxu0 %v2021
        %2338 = vmatpush.bf16.msra.mxu0 %v2017
        %2339 = vmatpush.bf16.msra.mxu0 %v2013
        %2340 = vmatpush.bf16.msra.mxu0 %v2009
        %2341 = vmatpush.bf16.msra.mxu0 %v2005
        %2342 = vmatpush.bf16.msra.mxu0 %v2001
        %2343 = vmatpush.bf16.msra.mxu0 %v1997
        %2344 = vmatmul.bf16.gmra.mxu0 %v1572
        %v2345 = vpop.f32.mrf.mxu0
        %v2346 = vadd.f32 %v2333, %v2345
        %v2347 = vpop.f32.mrf.mxu0
        %2348 = vdwg.mxu0
        %2349 = vmatpush.bf16.msra.mxu0 %v2057
        %2350 = vmatpush.bf16.msra.mxu0 %v2053
        %2351 = vmatpush.bf16.msra.mxu0 %v2049
        %2352 = vmatpush.bf16.msra.mxu0 %v2045
        %2353 = vmatpush.bf16.msra.mxu0 %v2041
        %2354 = vmatpush.bf16.msra.mxu0 %v2037
        %2355 = vmatpush.bf16.msra.mxu0 %v2033
        %2356 = vmatpush.bf16.msra.mxu0 %v2029
        %2357 = vmatmul.bf16.gmra.mxu0 %v1573
        %v2358 = vpop.f32.mrf.mxu0
        %v2359 = vadd.f32 %v2346, %v2358
        %v2360 = vpop.f32.mrf.mxu0
        %2361 = vdwg.mxu0
        %2362 = vmatpush.bf16.msra.mxu0 %v2089
        %2363 = vmatpush.bf16.msra.mxu0 %v2085
        %2364 = vmatpush.bf16.msra.mxu0 %v2081
        %2365 = vmatpush.bf16.msra.mxu0 %v2077
        %2366 = vmatpush.bf16.msra.mxu0 %v2073
        %2367 = vmatpush.bf16.msra.mxu0 %v2069
        %2368 = vmatpush.bf16.msra.mxu0 %v2065
        %2369 = vmatpush.bf16.msra.mxu0 %v2061
        %2370 = vmatmul.bf16.gmra.mxu0 %v1574
        %v2371 = vpop.f32.mrf.mxu0
        %v2372 = vadd.f32 %v2359, %v2371
        %v2373 = vpop.f32.mrf.mxu0
        %2374 = vdwg.mxu0
        %2375 = vmatpush.bf16.msra.mxu0 %v1994
        %2376 = vmatpush.bf16.msra.mxu0 %v1990
        %2377 = vmatpush.bf16.msra.mxu0 %v1986
        %2378 = vmatpush.bf16.msra.mxu0 %v1982
        %2379 = vmatpush.bf16.msra.mxu0 %v1978
        %2380 = vmatpush.bf16.msra.mxu0 %v1974
        %2381 = vmatpush.bf16.msra.mxu0 %v1970
        %2382 = vmatpush.bf16.msra.mxu0 %v1966
        %2383 = vmatmul.bf16.gmra.mxu0 %v1571
        %v2384 = vpop.f32.mrf.mxu0
        %v2385 = vadd.f32 %v1560, %v2384
        %v2386 = vpop.f32.mrf.mxu0
        %2387 = vdwg.mxu0
        %2388 = vmatpush.bf16.msra.mxu0 %v2026
        %2389 = vmatpush.bf16.msra.mxu0 %v2022
        %2390 = vmatpush.bf16.msra.mxu0 %v2018
        %2391 = vmatpush.bf16.msra.mxu0 %v2014
        %2392 = vmatpush.bf16.msra.mxu0 %v2010
        %2393 = vmatpush.bf16.msra.mxu0 %v2006
        %2394 = vmatpush.bf16.msra.mxu0 %v2002
        %2395 = vmatpush.bf16.msra.mxu0 %v1998
        %2396 = vmatmul.bf16.gmra.mxu0 %v1572
        %v2397 = vpop.f32.mrf.mxu0
        %v2398 = vadd.f32 %v2385, %v2397
        %v2399 = vpop.f32.mrf.mxu0
        %2400 = vdwg.mxu0
        %2401 = vmatpush.bf16.msra.mxu0 %v2058
        %2402 = vmatpush.bf16.msra.mxu0 %v2054
        %2403 = vmatpush.bf16.msra.mxu0 %v2050
        %2404 = vmatpush.bf16.msra.mxu0 %v2046
        %2405 = vmatpush.bf16.msra.mxu0 %v2042
        %2406 = vmatpush.bf16.msra.mxu0 %v2038
        %2407 = vmatpush.bf16.msra.mxu0 %v2034
        %2408 = vmatpush.bf16.msra.mxu0 %v2030
        %2409 = vmatmul.bf16.gmra.mxu0 %v1573
        %v2410 = vpop.f32.mrf.mxu0
        %v2411 = vadd.f32 %v2398, %v2410
        %v2412 = vpop.f32.mrf.mxu0
        %2413 = vdwg.mxu0
        %2414 = vmatpush.bf16.msra.mxu0 %v2090
        %2415 = vmatpush.bf16.msra.mxu0 %v2086
        %2416 = vmatpush.bf16.msra.mxu0 %v2082
        %2417 = vmatpush.bf16.msra.mxu0 %v2078
        %2418 = vmatpush.bf16.msra.mxu0 %v2074
        %2419 = vmatpush.bf16.msra.mxu0 %v2070
        %2420 = vmatpush.bf16.msra.mxu0 %v2066
        %2421 = vmatpush.bf16.msra.mxu0 %v2062
        %2422 = vmatmul.bf16.gmra.mxu0 %v1574
        %v2423 = vpop.f32.mrf.mxu0
        %v2424 = vadd.f32 %v2411, %v2423
        %v2425 = vpop.f32.mrf.mxu0
        %2426 = vdwg.mxu0
        %v2427 = vpack.c.bf16 %v2320, %v2268
        %v2428 = vpack.c.bf16 %v2424, %v2372
        %2429 = vst [vmem:[%s418] sm:$0xff] %v2427
        %2430 = vst [vmem:[%s418 + $0x8] sm:$0xff] %v2428
        %s2431 = sand.u32 %s194, 1
        %s2432 = scalar_lea.sflag [#allocation4], %s2431
        %s2433 = sand.u32 %s194, 1
        %s2434 = smul.addr %s2433, 16
        %s2435 = scalar_lea.vmem [#allocation11], %s2434
        %s2436 = sand.u32 %s222, 1
        %s2437 = scalar_lea.sflag [#allocation13], %s2436
        %s2438 = sand.u32 %s222, 1
        %s2439 = smul.addr %s2438, 16
        %s2440 = scalar_lea.vmem [#allocation12], %s2439
        // Predicated region
        $region65: #{tpu_custom_call.1} parent=43 // pred_check
          %p2441 = pneg %p204
        $region66: #{tpu_custom_call.1} parent=43 // pred_check_branch
          %2443 = sbr.rel (%p2441) target = $region68
        $region67: #{tpu_custom_call.1} parent=43 // pred_region
          %2445 = vsyncadd %s2432, 0
          %s2446 = smul.addr %s37, 4
          %s2447 = smul.addr %s36, 4
          %s2448 = sadd.s32 %s2446, %s2447
          %s2449 = smul.addr %s2448, 4
          %s2450 = scalar_lea.hbm %s6, %s2449
          %s2452 = sshll.u32 %s2435, 4
          %s2453 = int_to_ptr.vmem [resolvable:$true] %s2452
          %s2454 = sshll.u32 %s2450, 4
          %s2455 = int_to_ptr.hbm [resolvable:$true] %s2454
          %2457 = dma.vmem_to_hbm [thread:$0]  %s2453, 256, %s2455, %s2432
        $region68: #{tpu_custom_call.1} parent=43 // pred_fallthru
          _
        // Predicated region
        $region69: #{tpu_custom_call.1} parent=43 // pred_check
          %p2458 = pneg %p232
        $region70: #{tpu_custom_call.1} parent=43 // pred_check_branch
          %2460 = sbr.rel (%p2458) target = $region72
        $region71: #{tpu_custom_call.1} parent=43 // pred_region
          %2462 = vsyncadd %s2437, 0
          %s2463 = smul.addr %s37, 4
          %s2464 = smul.addr %s36, 4
          %s2465 = sadd.s32 %s2463, %s2464
          %s2466 = smul.addr %s2465, 4
          %s2467 = scalar_lea.hbm %s7, %s2466
          %s2469 = sshll.u32 %s2440, 4
          %s2470 = int_to_ptr.vmem [resolvable:$true] %s2469
          %s2471 = sshll.u32 %s2467, 4
          %s2472 = int_to_ptr.hbm [resolvable:$true] %s2471
          %2474 = dma.vmem_to_hbm [thread:$0]  %s2470, 256, %s2472, %s2437
        $region72: #{tpu_custom_call.1} parent=43 // pred_fallthru
          _
      $region44: #{tpu_custom_call.1} parent=5 // pred_fallthru
        _
      %p2475 = scmp.le.s32.totalorder 2, %s27
      // Predicated region
      $region73: #{tpu_custom_call.1} parent=5 // pred_check
        %p2476 = pneg %p2475
      $region74: #{tpu_custom_call.1} parent=5 // pred_check_branch
        %2478 = sbr.rel (%p2476) target = $region76
      $region75: #{tpu_custom_call.1} parent=5 // pred_region
        %s2479 = ssub.s32 %s27, 2
        // Predicated region
        $region77: #{tpu_custom_call.1} parent=75 // pred_check
          %p2480 = pneg %p210
        $region78: #{tpu_custom_call.1} parent=75 // pred_check_branch
          %2482 = sbr.rel (%p2480) target = $region80
        $region79: #{tpu_custom_call.1} parent=75 // pred_region
          %s2483 = sand.u32 %s195, 1
          %s2484 = scalar_lea.sflag [#allocation4], %s2483
          %s2485 = sand.u32 %s195, 1
          %s2486 = smul.addr %s2485, 16
          %s2487 = scalar_lea.vmem [#allocation11], %s2486
          %2489 = dma.done %s2484, 256
        $region80: #{tpu_custom_call.1} parent=75 // pred_fallthru
          _
        // Predicated region
        $region81: #{tpu_custom_call.1} parent=75 // pred_check
          %p2490 = pneg %p238
        $region82: #{tpu_custom_call.1} parent=75 // pred_check_branch
          %2492 = sbr.rel (%p2490) target = $region84
        $region83: #{tpu_custom_call.1} parent=75 // pred_region
          %s2493 = sand.u32 %s223, 1
          %s2494 = scalar_lea.sflag [#allocation13], %s2493
          %s2495 = sand.u32 %s223, 1
          %s2496 = smul.addr %s2495, 16
          %s2497 = scalar_lea.vmem [#allocation12], %s2496
          %2499 = dma.done %s2494, 256
        $region84: #{tpu_custom_call.1} parent=75 // pred_fallthru
          _
      $region76: #{tpu_custom_call.1} parent=5 // pred_fallthru
        _
    $region6: #{tpu_custom_call.1} parent=1 // loop_footer
      %s31 = sadd.s32 1, %s27
    $region7: #{tpu_custom_call.1} parent=1 // loop_footer_branch
      %26 = sbr.rel target = $region3
    $region8: #{tpu_custom_call.1} parent=1 // loop_exit
      _
    %2500 = vsyncpa [#allocation3], 1
    %s2501 = scalar_lea.sflag [#allocation3], 1
    %2502 = vsyncpa %s2501, 1
    %2503 = vsyncpa [#allocation6], 1
    %s2504 = scalar_lea.sflag [#allocation6], 1
    %2505 = vsyncpa %s2504, 1
    %2506 = vsyncpa [#allocation9], 1
    %2507 = vsyncpa [#allocation4], 1
    %s2508 = scalar_lea.sflag [#allocation4], 1
    %2509 = vsyncpa %s2508, 1
    %2510 = vsyncpa [#allocation13], 1
    %s2511 = scalar_lea.sflag [#allocation13], 1
    %2512 = vsyncpa %s2511, 1

</llo_original>
